<compile_context>
chip_gen: v7x
topology: tpu7x:2x2x1
jax: 0.10.0
libtpu: 0.0.40
codegen_flags: <defaults>
</compile_context>

<pallas_src>
import math

import jax
import jax.numpy as jnp
from jax.experimental import pallas as pl
from jax.experimental.pallas import tpu as pltpu

BN_EPS = 1e-5
TM_MAX = 512                            # M rows per grid step (multiple of 128)
VMEM_LIMIT_BYTES = 32 * 1024 * 1024     # safe on v5e/v6e/v7x, ample headroom


def _round_up(x, m):
    return ((x + m - 1) // m) * m


# ----------------------------------------------------------------------------
# Pallas kernels
# ----------------------------------------------------------------------------
def conv_block_kernel(w_ref, prm_ref, pT_ref, o_ref):
    """Fused im2col-matmul conv + bias + ReLU + BatchNorm (eval-mode affine).

    w_ref:   (Cout, K)   flattened conv weight, bf16 (K = Cin*KH*KW)
    prm_ref: (Cout, 3)   packed [conv_bias | bn_scale | bn_shift], f32
    pT_ref:  (K, TM)     transposed patch tile, bf16 (TM = lane-dense M tile)
    o_ref:   (Cout, TM)  output tile, bf16
    """
    acc = jnp.dot(w_ref[...], pT_ref[...], preferred_element_type=jnp.float32)
    bias = prm_ref[:, 0:1]       # (Cout, 1) broadcast over lanes
    scale = prm_ref[:, 1:2]
    shift = prm_ref[:, 2:3]
    acc = jnp.maximum(acc + bias, 0.0)          # conv bias, then ReLU (as in module)
    o_ref[...] = (acc * scale + shift).astype(o_ref.dtype)


def head_kernel(f_ref, w_ref, b_ref, o_ref):
    """Fused AdaptiveAvgPool2d(1) + Linear.

    f_ref: (C, N, S)  last conv features (channels-major), bf16
    w_ref: (10, C)    linear weight, f32
    b_ref: (1, 10)    linear bias, f32
    o_ref: (N, 10)    logits, f32
    """
    pooled = jnp.mean(f_ref[...].astype(jnp.float32), axis=2)      # (C, N)
    logits = jax.lax.dot_general(
        pooled, w_ref[...],
        dimension_numbers=(((0,), (1,)), ((), ())),                # contract C
        preferred_element_type=jnp.float32)                        # (N, 10)
    o_ref[...] = logits + b_ref[...]


# ----------------------------------------------------------------------------
# Wrappers around pallas_call
# ----------------------------------------------------------------------------
def run_conv_block(patches_t, w_flat, packed_prm):
    """patches_t: (K, M) bf16, w_flat: (Cout, K) bf16, packed_prm: (Cout, 3) f32
    -> (Cout, M) bf16."""
    K, M = patches_t.shape
    Cout = w_flat.shape[0]

    tm = min(TM_MAX, _round_up(M, 128))
    m_pad = _round_up(M, tm)
    if m_pad != M:
        patches_t = jnp.pad(patches_t, ((0, 0), (0, m_pad - M)))

    out = pl.pallas_call(
        conv_block_kernel,
        out_shape=jax.ShapeDtypeStruct((Cout, m_pad), jnp.bfloat16),
        grid=(m_pad // tm,),
        in_specs=[
            pl.BlockSpec((Cout, K), lambda i: (0, 0)),   # weights: VMEM-resident
            pl.BlockSpec((Cout, 3), lambda i: (0, 0)),   # packed bias/scale/shift
            pl.BlockSpec((K, tm), lambda i: (0, i)),     # patch tile: pipelined
        ],
        out_specs=pl.BlockSpec((Cout, tm), lambda i: (0, i)),
        compiler_params=pltpu.CompilerParams(
            dimension_semantics=("parallel",),           # shards M across TCs (v7x)
            vmem_limit_bytes=VMEM_LIMIT_BYTES,
        ),
    )(w_flat, packed_prm, patches_t)
    return out[:, :M] if m_pad != M else out


def run_head(feat_cns, w_lin, b_lin):
    C, N, S = feat_cns.shape
    Nout = w_lin.shape[0]
    return pl.pallas_call(
        head_kernel,
        out_shape=jax.ShapeDtypeStruct((N, Nout), jnp.float32),
        grid=(1,),
        in_specs=[
            pl.BlockSpec((C, N, S), lambda i: (0, 0, 0)),
            pl.BlockSpec((Nout, C), lambda i: (0, 0)),
            pl.BlockSpec((1, Nout), lambda i: (0, 0)),
        ],
        out_specs=pl.BlockSpec((N, Nout), lambda i: (0, 0)),
        compiler_params=pltpu.CompilerParams(
            dimension_semantics=("arbitrary",),
            vmem_limit_bytes=VMEM_LIMIT_BYTES,
        ),
    )(feat_cns, w_lin, b_lin.reshape(1, Nout))


# ----------------------------------------------------------------------------
# Glue: im2col in channels-major (C, N, H, W) layout -> patches^T (K, M)
# ----------------------------------------------------------------------------
def im2col_cnhw(x, kh, kw, sh, sw, ph, pw):
    """x: (C, N, H, W) -> patches^T (C*kh*kw, N*OH*OW).

    K ordering (c major, then ki, kj) matches PyTorch weight.reshape(
    Cout, Cin*kh*kw). M ordering is (n, oh, ow) so the (Cout, M) kernel output
    reshapes directly to the next layer's (C, N, H, W) input (no transpose).
    """
    C, N, H, W = x.shape
    OH = (H + 2 * ph - kh) // sh + 1
    OW = (W + 2 * pw - kw) // sw + 1
    xp = jnp.pad(x, ((0, 0), (0, 0), (ph, ph), (pw, pw)))
    cols = []
    for ki in range(kh):
        for kj in range(kw):
            cols.append(xp[:, :, ki:ki + sh * OH:sh, kj:kj + sw * OW:sw])  # (C,N,OH,OW)
    p = jnp.stack(cols, axis=1)                        # (C, kh*kw, N, OH, OW)
    p = p.reshape(C * kh * kw, N * OH * OW)            # (K, M)
    return p, OH, OW


# ----------------------------------------------------------------------------
# Parameter init (deterministic, mirrors AudioClassifier.__init__)
# ----------------------------------------------------------------------------
CONV_CFGS = [
    # (cin, cout, kh, kw, stride, pad)
    (1, 8, 5, 5, 2, 2),
    (8, 16, 3, 3, 2, 1),
    (16, 32, 3, 3, 2, 1),
    (32, 64, 3, 3, 2, 1),
]


def kaiming_normal_conv(key, cout, cin, kh, kw, a=0.1):
    fan_in = cin * kh * kw
    gain = math.sqrt(2.0 / (1.0 + a * a))
    std = gain / math.sqrt(fan_in)
    return jax.random.normal(key, (cout, cin, kh, kw), dtype=jnp.float32) * std


def make_params(key):
    keys = jax.random.split(key, len(CONV_CFGS) + 2)
    params = {"conv": []}
    for i, (cin, cout, kh, kw, s, p) in enumerate(CONV_CFGS):
        w = kaiming_normal_conv(keys[i], cout, cin, kh, kw, a=0.1)
        b = jnp.zeros((cout,), jnp.float32)      # conv bias zeroed (as in module)
        gamma = jnp.ones((cout,), jnp.float32)   # BN affine / running-stat defaults
        beta = jnp.zeros((cout,), jnp.float32)
        mean = jnp.zeros((cout,), jnp.float32)
        var = jnp.ones((cout,), jnp.float32)
        params["conv"].append(
            dict(w=w, b=b, gamma=gamma, beta=beta, mean=mean, var=var,
                 cfg=(cin, cout, kh, kw, s, p)))
    bound = 1.0 / math.sqrt(64.0)                # PyTorch nn.Linear default init
    params["lin_w"] = jax.random.uniform(keys[-2], (10, 64), jnp.float32, -bound, bound)
    params["lin_b"] = jax.random.uniform(keys[-1], (10,), jnp.float32, -bound, bound)
    return params


def prep_layer(layer):
    """One-time per-layer packing: bf16 flattened weight + packed f32 params."""
    cin, cout, kh, kw, s, p = layer["cfg"]
    w_flat = layer["w"].reshape(cout, cin * kh * kw).astype(jnp.bfloat16)  # (Cout, K)
    scale = layer["gamma"] / jnp.sqrt(layer["var"] + BN_EPS)
    shift = layer["beta"] - layer["mean"] * scale
    packed = jnp.stack([layer["b"], scale, shift], axis=1)                 # (Cout, 3)
    return w_flat, packed, (kh, kw, s, p)


# ----------------------------------------------------------------------------
# Forward pass
# ----------------------------------------------------------------------------
def audio_classifier_forward(x, params):
    """x: (N, 1, H, W) NCHW float32 -> (N, 10) logits."""
    N = x.shape[0]
    # channels-major layout, bf16, kept end-to-end (no per-layer transposes).
    cur = jnp.transpose(x, (1, 0, 2, 3)).astype(jnp.bfloat16)   # (C, N, H, W)
    for layer in params["conv"]:
        w_flat, packed, (kh, kw, s, p) = prep_layer(layer)
        patches_t, OH, OW = im2col_cnhw(cur, kh, kw, s, s, p, p)  # (K, N*OH*OW)
        out = run_conv_block(patches_t, w_flat, packed)           # (Cout, N*OH*OW)
        cur = out.reshape(w_flat.shape[0], N, OH, OW)             # (Cout, N, OH, OW)
    C, _, OH, OW = cur.shape
    feat = cur.reshape(C, N, OH * OW)                             # (C, N, S)
    return run_head(feat, params["lin_w"], params["lin_b"])


if __name__ == "__main__":
    key = jax.random.PRNGKey(0)
    pkey, xkey = jax.random.split(key)
    params = make_params(pkey)

    # small spectrogram-like input: batch=2, 1 channel, 16x16
    x = jax.random.normal(xkey, (2, 1, 16, 16), dtype=jnp.float32)

    logits = jax.jit(lambda xx: audio_classifier_forward(xx, params))(x)
    logits = jax.block_until_ready(logits)

    assert logits.shape == (2, 10), logits.shape
    assert bool(jnp.all(jnp.isfinite(logits)))
    print("KERNEL_OK")
</pallas_src>

<mosaic_0001>
module attributes {stable_mosaic.version = 11 : i64} {
  func.func @conv_block_kernel(%arg0: i32, %arg1: memref<8x25xbf16, #tpu.memory_space<vmem>>, %arg2: memref<8x3xf32, #tpu.memory_space<vmem>>, %arg3: memref<25x128xbf16, #tpu.memory_space<vmem>>, %arg4: memref<8x128xbf16, #tpu.memory_space<vmem>>) attributes {dimension_semantics = [#tpu.dimension_semantics<parallel>], iteration_bounds = array<i64: 1>, scalar_prefetch = 0 : i64, scratch_operands = 0 : i64, tpu.core_type = #tpu.core_type<tc>, window_params = [{pipeline_mode = #tpu.pipeline_mode<synchronous>, transform_indices = @transform_0, window_bounds = array<i64: 8, 25>}, {pipeline_mode = #tpu.pipeline_mode<synchronous>, transform_indices = @transform_1, window_bounds = array<i64: 8, 3>}, {transform_indices = @transform_2, window_bounds = array<i64: 25, 128>}, {transform_indices = @transform_3, window_bounds = array<i64: 8, 128>}]} {
    %c0 = arith.constant 0 : index
    %c0_0 = arith.constant 0 : index
    %0 = vector.load %arg1[%c0, %c0_0] : memref<8x25xbf16, #tpu.memory_space<vmem>>, vector<8x25xbf16>
    %c0_1 = arith.constant 0 : index
    %c0_2 = arith.constant 0 : index
    %1 = vector.load %arg3[%c0_1, %c0_2] : memref<25x128xbf16, #tpu.memory_space<vmem>>, vector<25x128xbf16>
    %cst = arith.constant dense<0.000000e+00> : vector<8x128xf32>
    %2 = tpu.matmul %0, %1, %cst {dimension_numbers = #tpu.dot_dimension_numbers<[1], [0], [0], [1], [0, 0, 1, 1], [], []>} : vector<8x25xbf16>, vector<25x128xbf16>, vector<8x128xf32> -> vector<8x128xf32>
    %c0_3 = arith.constant 0 : index
    %c0_4 = arith.constant 0 : index
    %3 = vector.load %arg2[%c0_3, %c0_4] : memref<8x3xf32, #tpu.memory_space<vmem>>, vector<8x1xf32>
    %c0_5 = arith.constant 0 : index
    %c1 = arith.constant 1 : index
    %4 = vector.load %arg2[%c0_5, %c1] : memref<8x3xf32, #tpu.memory_space<vmem>>, vector<8x1xf32>
    %c0_6 = arith.constant 0 : index
    %c2 = arith.constant 2 : index
    %5 = vector.load %arg2[%c0_6, %c2] : memref<8x3xf32, #tpu.memory_space<vmem>>, vector<8x1xf32>
    %6 = vector.broadcast %3 : vector<8x1xf32> to vector<8x128xf32>
    %7 = arith.addf %2, %6 : vector<8x128xf32>
    %cst_7 = arith.constant 0.000000e+00 : f32
    %8 = vector.broadcast %cst_7 : f32 to vector<8x128xf32>
    %9 = arith.maximumf %7, %8 : vector<8x128xf32>
    %10 = vector.broadcast %4 : vector<8x1xf32> to vector<8x128xf32>
    %11 = arith.mulf %9, %10 : vector<8x128xf32>
    %12 = vector.broadcast %5 : vector<8x1xf32> to vector<8x128xf32>
    %13 = arith.addf %11, %12 : vector<8x128xf32>
    %14 = arith.truncf %13 : vector<8x128xf32> to vector<8x128xbf16>
    %c0_8 = arith.constant 0 : index
    %c0_9 = arith.constant 0 : index
    %15 = vector.load %arg4[%c0_8, %c0_9] : memref<8x128xbf16, #tpu.memory_space<vmem>>, vector<8x128xbf16>
    tpu.vector_store %arg4[%c0_8, %c0_9], %14 {strides = array<i32>} : memref<8x128xbf16, #tpu.memory_space<vmem>>, vector<8x128xbf16>,
    return
  }
  func.func @transform_0(%arg0: i32) -> (i32, i32) {
    %c0_i32 = arith.constant 0 : i32
    %c0_i32_0 = arith.constant 0 : i32
    %c0_i32_1 = arith.constant 0 : i32
    return %c0_i32, %c0_i32_0 : i32, i32
  }
  func.func @transform_1(%arg0: i32) -> (i32, i32) {
    %c0_i32 = arith.constant 0 : i32
    %c0_i32_0 = arith.constant 0 : i32
    %c0_i32_1 = arith.constant 0 : i32
    return %c0_i32, %c0_i32_0 : i32, i32
  }
  func.func @transform_2(%arg0: i32) -> (i32, i32) {
    %c0_i32 = arith.constant 0 : i32
    %c0_i32_0 = arith.constant 0 : i32
    return %c0_i32, %arg0 : i32, i32
  }
  func.func @transform_3(%arg0: i32) -> (i32, i32) {
    %c0_i32 = arith.constant 0 : i32
    %c0_i32_0 = arith.constant 0 : i32
    return %c0_i32, %arg0 : i32, i32
  }
}

module attributes {stable_mosaic.version = 11 : i64} {
  func.func @conv_block_kernel(%arg0: i32, %arg1: memref<16x72xbf16, #tpu.memory_space<vmem>>, %arg2: memref<16x3xf32, #tpu.memory_space<vmem>>, %arg3: memref<72x128xbf16, #tpu.memory_space<vmem>>, %arg4: memref<16x128xbf16, #tpu.memory_space<vmem>>) attributes {dimension_semantics = [#tpu.dimension_semantics<parallel>], iteration_bounds = array<i64: 1>, scalar_prefetch = 0 : i64, scratch_operands = 0 : i64, tpu.core_type = #tpu.core_type<tc>, window_params = [{pipeline_mode = #tpu.pipeline_mode<synchronous>, transform_indices = @transform_0, window_bounds = array<i64: 16, 72>}, {pipeline_mode = #tpu.pipeline_mode<synchronous>, transform_indices = @transform_1, window_bounds = array<i64: 16, 3>}, {transform_indices = @transform_2, window_bounds = array<i64: 72, 128>}, {transform_indices = @transform_3, window_bounds = array<i64: 16, 128>}]} {
    %c0 = arith.constant 0 : index
    %c0_0 = arith.constant 0 : index
    %0 = vector.load %arg1[%c0, %c0_0] : memref<16x72xbf16, #tpu.memory_space<vmem>>, vector<16x72xbf16>
    %c0_1 = arith.constant 0 : index
    %c0_2 = arith.constant 0 : index
    %1 = vector.load %arg3[%c0_1, %c0_2] : memref<72x128xbf16, #tpu.memory_space<vmem>>, vector<72x128xbf16>
    %cst = arith.constant dense<0.000000e+00> : vector<16x128xf32>
    %2 = tpu.matmul %0, %1, %cst {dimension_numbers = #tpu.dot_dimension_numbers<[1], [0], [0], [1], [0, 0, 1, 1], [], []>} : vector<16x72xbf16>, vector<72x128xbf16>, vector<16x128xf32> -> vector<16x128xf32>
    %c0_3 = arith.constant 0 : index
    %c0_4 = arith.constant 0 : index
    %3 = vector.load %arg2[%c0_3, %c0_4] : memref<16x3xf32, #tpu.memory_space<vmem>>, vector<16x1xf32>
    %c0_5 = arith.constant 0 : index
    %c1 = arith.constant 1 : index
    %4 = vector.load %arg2[%c0_5, %c1] : memref<16x3xf32, #tpu.memory_space<vmem>>, vector<16x1xf32>
    %c0_6 = arith.constant 0 : index
    %c2 = arith.constant 2 : index
    %5 = vector.load %arg2[%c0_6, %c2] : memref<16x3xf32, #tpu.memory_space<vmem>>, vector<16x1xf32>
    %6 = vector.broadcast %3 : vector<16x1xf32> to vector<16x128xf32>
    %7 = arith.addf %2, %6 : vector<16x128xf32>
    %cst_7 = arith.constant 0.000000e+00 : f32
    %8 = vector.broadcast %cst_7 : f32 to vector<16x128xf32>
    %9 = arith.maximumf %7, %8 : vector<16x128xf32>
    %10 = vector.broadcast %4 : vector<16x1xf32> to vector<16x128xf32>
    %11 = arith.mulf %9, %10 : vector<16x128xf32>
    %12 = vector.broadcast %5 : vector<16x1xf32> to vector<16x128xf32>
    %13 = arith.addf %11, %12 : vector<16x128xf32>
    %14 = arith.truncf %13 : vector<16x128xf32> to vector<16x128xbf16>
    %c0_8 = arith.constant 0 : index
    %c0_9 = arith.constant 0 : index
    %15 = vector.load %arg4[%c0_8, %c0_9] : memref<16x128xbf16, #tpu.memory_space<vmem>>, vector<16x128xbf16>
    tpu.vector_store %arg4[%c0_8, %c0_9], %14 {strides = array<i32>} : memref<16x128xbf16, #tpu.memory_space<vmem>>, vector<16x128xbf16>,
    return
  }
  func.func @transform_0(%arg0: i32) -> (i32, i32) {
    %c0_i32 = arith.constant 0 : i32
    %c0_i32_0 = arith.constant 0 : i32
    %c0_i32_1 = arith.constant 0 : i32
    return %c0_i32, %c0_i32_0 : i32, i32
  }
  func.func @transform_1(%arg0: i32) -> (i32, i32) {
    %c0_i32 = arith.constant 0 : i32
    %c0_i32_0 = arith.constant 0 : i32
    %c0_i32_1 = arith.constant 0 : i32
    return %c0_i32, %c0_i32_0 : i32, i32
  }
  func.func @transform_2(%arg0: i32) -> (i32, i32) {
    %c0_i32 = arith.constant 0 : i32
    %c0_i32_0 = arith.constant 0 : i32
    return %c0_i32, %arg0 : i32, i32
  }
  func.func @transform_3(%arg0: i32) -> (i32, i32) {
    %c0_i32 = arith.constant 0 : i32
    %c0_i32_0 = arith.constant 0 : i32
    return %c0_i32, %arg0 : i32, i32
  }
}

module attributes {stable_mosaic.version = 11 : i64} {
  func.func @conv_block_kernel(%arg0: i32, %arg1: memref<32x144xbf16, #tpu.memory_space<vmem>>, %arg2: memref<32x3xf32, #tpu.memory_space<vmem>>, %arg3: memref<144x128xbf16, #tpu.memory_space<vmem>>, %arg4: memref<32x128xbf16, #tpu.memory_space<vmem>>) attributes {dimension_semantics = [#tpu.dimension_semantics<parallel>], iteration_bounds = array<i64: 1>, scalar_prefetch = 0 : i64, scratch_operands = 0 : i64, tpu.core_type = #tpu.core_type<tc>, window_params = [{pipeline_mode = #tpu.pipeline_mode<synchronous>, transform_indices = @transform_0, window_bounds = array<i64: 32, 144>}, {pipeline_mode = #tpu.pipeline_mode<synchronous>, transform_indices = @transform_1, window_bounds = array<i64: 32, 3>}, {transform_indices = @transform_2, window_bounds = array<i64: 144, 128>}, {transform_indices = @transform_3, window_bounds = array<i64: 32, 128>}]} {
    %c0 = arith.constant 0 : index
    %c0_0 = arith.constant 0 : index
    %0 = vector.load %arg1[%c0, %c0_0] : memref<32x144xbf16, #tpu.memory_space<vmem>>, vector<32x144xbf16>
    %c0_1 = arith.constant 0 : index
    %c0_2 = arith.constant 0 : index
    %1 = vector.load %arg3[%c0_1, %c0_2] : memref<144x128xbf16, #tpu.memory_space<vmem>>, vector<144x128xbf16>
    %cst = arith.constant dense<0.000000e+00> : vector<32x128xf32>
    %2 = tpu.matmul %0, %1, %cst {dimension_numbers = #tpu.dot_dimension_numbers<[1], [0], [0], [1], [0, 0, 1, 1], [], []>} : vector<32x144xbf16>, vector<144x128xbf16>, vector<32x128xf32> -> vector<32x128xf32>
    %c0_3 = arith.constant 0 : index
    %c0_4 = arith.constant 0 : index
    %3 = vector.load %arg2[%c0_3, %c0_4] : memref<32x3xf32, #tpu.memory_space<vmem>>, vector<32x1xf32>
    %c0_5 = arith.constant 0 : index
    %c1 = arith.constant 1 : index
    %4 = vector.load %arg2[%c0_5, %c1] : memref<32x3xf32, #tpu.memory_space<vmem>>, vector<32x1xf32>
    %c0_6 = arith.constant 0 : index
    %c2 = arith.constant 2 : index
    %5 = vector.load %arg2[%c0_6, %c2] : memref<32x3xf32, #tpu.memory_space<vmem>>, vector<32x1xf32>
    %6 = vector.broadcast %3 : vector<32x1xf32> to vector<32x128xf32>
    %7 = arith.addf %2, %6 : vector<32x128xf32>
    %cst_7 = arith.constant 0.000000e+00 : f32
    %8 = vector.broadcast %cst_7 : f32 to vector<32x128xf32>
    %9 = arith.maximumf %7, %8 : vector<32x128xf32>
    %10 = vector.broadcast %4 : vector<32x1xf32> to vector<32x128xf32>
    %11 = arith.mulf %9, %10 : vector<32x128xf32>
    %12 = vector.broadcast %5 : vector<32x1xf32> to vector<32x128xf32>
    %13 = arith.addf %11, %12 : vector<32x128xf32>
    %14 = arith.truncf %13 : vector<32x128xf32> to vector<32x128xbf16>
    %c0_8 = arith.constant 0 : index
    %c0_9 = arith.constant 0 : index
    %15 = vector.load %arg4[%c0_8, %c0_9] : memref<32x128xbf16, #tpu.memory_space<vmem>>, vector<32x128xbf16>
    tpu.vector_store %arg4[%c0_8, %c0_9], %14 {strides = array<i32>} : memref<32x128xbf16, #tpu.memory_space<vmem>>, vector<32x128xbf16>,
    return
  }
  func.func @transform_0(%arg0: i32) -> (i32, i32) {
    %c0_i32 = arith.constant 0 : i32
    %c0_i32_0 = arith.constant 0 : i32
    %c0_i32_1 = arith.constant 0 : i32
    return %c0_i32, %c0_i32_0 : i32, i32
  }
  func.func @transform_1(%arg0: i32) -> (i32, i32) {
    %c0_i32 = arith.constant 0 : i32
    %c0_i32_0 = arith.constant 0 : i32
    %c0_i32_1 = arith.constant 0 : i32
    return %c0_i32, %c0_i32_0 : i32, i32
  }
  func.func @transform_2(%arg0: i32) -> (i32, i32) {
    %c0_i32 = arith.constant 0 : i32
    %c0_i32_0 = arith.constant 0 : i32
    return %c0_i32, %arg0 : i32, i32
  }
  func.func @transform_3(%arg0: i32) -> (i32, i32) {
    %c0_i32 = arith.constant 0 : i32
    %c0_i32_0 = arith.constant 0 : i32
    return %c0_i32, %arg0 : i32, i32
  }
}

module attributes {stable_mosaic.version = 11 : i64} {
  func.func @head_kernel(%arg0: i32, %arg1: memref<64x2x1xbf16, #tpu.memory_space<vmem>>, %arg2: memref<10x64xf32, #tpu.memory_space<vmem>>, %arg3: memref<1x10xf32, #tpu.memory_space<vmem>>, %arg4: memref<2x10xf32, #tpu.memory_space<vmem>>) attributes {dimension_semantics = [#tpu.dimension_semantics<arbitrary>], iteration_bounds = array<i64: 1>, scalar_prefetch = 0 : i64, scratch_operands = 0 : i64, tpu.core_type = #tpu.core_type<tc>, window_params = [{pipeline_mode = #tpu.pipeline_mode<synchronous>, transform_indices = @transform_0, window_bounds = array<i64: 64, 2, 1>}, {pipeline_mode = #tpu.pipeline_mode<synchronous>, transform_indices = @transform_1, window_bounds = array<i64: 10, 64>}, {pipeline_mode = #tpu.pipeline_mode<synchronous>, transform_indices = @transform_2, window_bounds = array<i64: 1, 10>}, {pipeline_mode = #tpu.pipeline_mode<synchronous>, transform_indices = @transform_3, window_bounds = array<i64: 2, 10>}]} {
    %c0 = arith.constant 0 : index
    %c0_0 = arith.constant 0 : index
    %c0_1 = arith.constant 0 : index
    %0 = vector.load %arg1[%c0, %c0_0, %c0_1] : memref<64x2x1xbf16, #tpu.memory_space<vmem>>, vector<64x2x1xbf16>
    %1 = arith.extf %0 : vector<64x2x1xbf16> to vector<64x2x1xf32>
    %cst = arith.constant dense<0.000000e+00> : vector<64x2xf32>
    %2 = vector.multi_reduction <add>, %1, %cst [2] : vector<64x2x1xf32> to vector<64x2xf32>
    %cst_2 = arith.constant 1.000000e+00 : f32
    %3 = vector.broadcast %cst_2 : f32 to vector<64x2xf32>
    %4 = arith.divf %2, %3 : vector<64x2xf32>
    %c0_3 = arith.constant 0 : index
    %c0_4 = arith.constant 0 : index
    %5 = vector.load %arg2[%c0_3, %c0_4] : memref<10x64xf32, #tpu.memory_space<vmem>>, vector<10x64xf32>
    %cst_5 = arith.constant dense<0.000000e+00> : vector<2x10xf32>
    %6 = tpu.matmul %4, %5, %cst_5 {dimension_numbers = #tpu.dot_dimension_numbers<[0], [1], [1], [0], [0, 1, 1, 0], [], []>} : vector<64x2xf32>, vector<10x64xf32>, vector<2x10xf32> -> vector<2x10xf32>
    %c0_6 = arith.constant 0 : index
    %c0_7 = arith.constant 0 : index
    %7 = vector.load %arg3[%c0_6, %c0_7] : memref<1x10xf32, #tpu.memory_space<vmem>>, vector<1x10xf32>
    %8 = vector.broadcast %7 : vector<1x10xf32> to vector<2x10xf32>
    %9 = arith.addf %6, %8 : vector<2x10xf32>
    %c0_8 = arith.constant 0 : index
    %c0_9 = arith.constant 0 : index
    %10 = vector.load %arg4[%c0_8, %c0_9] : memref<2x10xf32, #tpu.memory_space<vmem>>, vector<2x10xf32>
    tpu.vector_store %arg4[%c0_8, %c0_9], %9 {strides = array<i32>} : memref<2x10xf32, #tpu.memory_space<vmem>>, vector<2x10xf32>,
    return
  }
  func.func @transform_0(%arg0: i32) -> (i32, i32, i32) {
    %c0_i32 = arith.constant 0 : i32
    %c0_i32_0 = arith.constant 0 : i32
    %c0_i32_1 = arith.constant 0 : i32
    %c0_i32_2 = arith.constant 0 : i32
    return %c0_i32, %c0_i32_0, %c0_i32_1 : i32, i32, i32
  }
  func.func @transform_1(%arg0: i32) -> (i32, i32) {
    %c0_i32 = arith.constant 0 : i32
    %c0_i32_0 = arith.constant 0 : i32
    %c0_i32_1 = arith.constant 0 : i32
    return %c0_i32, %c0_i32_0 : i32, i32
  }
  func.func @transform_2(%arg0: i32) -> (i32, i32) {
    %c0_i32 = arith.constant 0 : i32
    %c0_i32_0 = arith.constant 0 : i32
    %c0_i32_1 = arith.constant 0 : i32
    return %c0_i32, %c0_i32_0 : i32, i32
  }
  func.func @transform_3(%arg0: i32) -> (i32, i32) {
    %c0_i32 = arith.constant 0 : i32
    %c0_i32_0 = arith.constant 0 : i32
    %c0_i32_1 = arith.constant 0 : i32
    return %c0_i32, %c0_i32_0 : i32, i32
  }
}

module attributes {stable_mosaic.version = 11 : i64} {
  func.func @conv_block_kernel(%arg0: i32, %arg1: memref<64x288xbf16, #tpu.memory_space<vmem>>, %arg2: memref<64x3xf32, #tpu.memory_space<vmem>>, %arg3: memref<288x128xbf16, #tpu.memory_space<vmem>>, %arg4: memref<64x128xbf16, #tpu.memory_space<vmem>>) attributes {dimension_semantics = [#tpu.dimension_semantics<parallel>], iteration_bounds = array<i64: 1>, scalar_prefetch = 0 : i64, scratch_operands = 0 : i64, tpu.core_type = #tpu.core_type<tc>, window_params = [{pipeline_mode = #tpu.pipeline_mode<synchronous>, transform_indices = @transform_0, window_bounds = array<i64: 64, 288>}, {pipeline_mode = #tpu.pipeline_mode<synchronous>, transform_indices = @transform_1, window_bounds = array<i64: 64, 3>}, {transform_indices = @transform_2, window_bounds = array<i64: 288, 128>}, {transform_indices = @transform_3, window_bounds = array<i64: 64, 128>}]} {
    %c0 = arith.constant 0 : index
    %c0_0 = arith.constant 0 : index
    %0 = vector.load %arg1[%c0, %c0_0] : memref<64x288xbf16, #tpu.memory_space<vmem>>, vector<64x288xbf16>
    %c0_1 = arith.constant 0 : index
    %c0_2 = arith.constant 0 : index
    %1 = vector.load %arg3[%c0_1, %c0_2] : memref<288x128xbf16, #tpu.memory_space<vmem>>, vector<288x128xbf16>
    %cst = arith.constant dense<0.000000e+00> : vector<64x128xf32>
    %2 = tpu.matmul %0, %1, %cst {dimension_numbers = #tpu.dot_dimension_numbers<[1], [0], [0], [1], [0, 0, 1, 1], [], []>} : vector<64x288xbf16>, vector<288x128xbf16>, vector<64x128xf32> -> vector<64x128xf32>
    %c0_3 = arith.constant 0 : index
    %c0_4 = arith.constant 0 : index
    %3 = vector.load %arg2[%c0_3, %c0_4] : memref<64x3xf32, #tpu.memory_space<vmem>>, vector<64x1xf32>
    %c0_5 = arith.constant 0 : index
    %c1 = arith.constant 1 : index
    %4 = vector.load %arg2[%c0_5, %c1] : memref<64x3xf32, #tpu.memory_space<vmem>>, vector<64x1xf32>
    %c0_6 = arith.constant 0 : index
    %c2 = arith.constant 2 : index
    %5 = vector.load %arg2[%c0_6, %c2] : memref<64x3xf32, #tpu.memory_space<vmem>>, vector<64x1xf32>
    %6 = vector.broadcast %3 : vector<64x1xf32> to vector<64x128xf32>
    %7 = arith.addf %2, %6 : vector<64x128xf32>
    %cst_7 = arith.constant 0.000000e+00 : f32
    %8 = vector.broadcast %cst_7 : f32 to vector<64x128xf32>
    %9 = arith.maximumf %7, %8 : vector<64x128xf32>
    %10 = vector.broadcast %4 : vector<64x1xf32> to vector<64x128xf32>
    %11 = arith.mulf %9, %10 : vector<64x128xf32>
    %12 = vector.broadcast %5 : vector<64x1xf32> to vector<64x128xf32>
    %13 = arith.addf %11, %12 : vector<64x128xf32>
    %14 = arith.truncf %13 : vector<64x128xf32> to vector<64x128xbf16>
    %c0_8 = arith.constant 0 : index
    %c0_9 = arith.constant 0 : index
    %15 = vector.load %arg4[%c0_8, %c0_9] : memref<64x128xbf16, #tpu.memory_space<vmem>>, vector<64x128xbf16>
    tpu.vector_store %arg4[%c0_8, %c0_9], %14 {strides = array<i32>} : memref<64x128xbf16, #tpu.memory_space<vmem>>, vector<64x128xbf16>,
    return
  }
  func.func @transform_0(%arg0: i32) -> (i32, i32) {
    %c0_i32 = arith.constant 0 : i32
    %c0_i32_0 = arith.constant 0 : i32
    %c0_i32_1 = arith.constant 0 : i32
    return %c0_i32, %c0_i32_0 : i32, i32
  }
  func.func @transform_1(%arg0: i32) -> (i32, i32) {
    %c0_i32 = arith.constant 0 : i32
    %c0_i32_0 = arith.constant 0 : i32
    %c0_i32_1 = arith.constant 0 : i32
    return %c0_i32, %c0_i32_0 : i32, i32
  }
  func.func @transform_2(%arg0: i32) -> (i32, i32) {
    %c0_i32 = arith.constant 0 : i32
    %c0_i32_0 = arith.constant 0 : i32
    return %c0_i32, %arg0 : i32, i32
  }
  func.func @transform_3(%arg0: i32) -> (i32, i32) {
    %c0_i32 = arith.constant 0 : i32
    %c0_i32_0 = arith.constant 0 : i32
    return %c0_i32, %arg0 : i32, i32
  }
}

</mosaic_0001>

<llo_original>
// kernel: _lambda_.5
$region0: #{_lambda_.5}
  #allocation0 [shape = 'u32[]', space=smem, size = 0x4, offset = 0x4, fixed_abs, tag = 'smem constant byte address 0x4 - core index']
  #allocation1 [shape = 'u32[144,128]{1,0:T(1,128)}', space=vmem, size = 0x12000, scoped, tag = 'internal scratch']
  %s0 = inlined_call_operand.vmem [shape: bf16[8,25], index: 0, kind: input, shape index: {}]
  %s1 = inlined_call_operand.vmem [shape: f32[8,3], index: 1, kind: input, shape index: {}]
  %s2 = inlined_call_operand.vmem [shape: bf16[25,128], index: 2, kind: input, shape index: {}]
  %s3 = inlined_call_operand.vmem [shape: bf16[8,128], index: 3, kind: output, shape index: {}]
  %s4 = sld [smem:[#allocation0]]
  $region22: #{_lambda_.5} parent=0
    _
  %s6 = ssub.s32 1, %s4
  %s7 = scalar_select 0, %s6, %s4
  // Predicated region
  $region2: #{_lambda_.5} parent=0 // pred_check
    _
  $region3: #{_lambda_.5} parent=0 // pred_check_branch
    %9 = sbr.rel (0) target = $region5
  $region4: #{_lambda_.5} parent=0 // pred_region
    _
  $region5: #{_lambda_.5} parent=0 // pred_fallthru
    _
  // Predicated region
  $region6: #{_lambda_.5} parent=0 // pred_check
    _
  $region7: #{_lambda_.5} parent=0 // pred_check_branch
    %11 = sbr.rel (0) target = $region9
  $region8: #{_lambda_.5} parent=0 // pred_region
    _
  $region9: #{_lambda_.5} parent=0 // pred_fallthru
    _
  // Predicated region
  $region10: #{_lambda_.5} parent=0 // pred_check
    _
  $region11: #{_lambda_.5} parent=0 // pred_check_branch
    %13 = sbr.rel (0) target = $region13
  $region12: #{_lambda_.5} parent=0 // pred_region
    _
  $region13: #{_lambda_.5} parent=0 // pred_fallthru
    _
  %v15 = vld [vmem:[%s0] sm:$0xf]
  %v16 = vld [vmem:[%s2] sm:$0xf]
  %v17 = vld [vmem:[%s2 + $0x4] sm:$0xf]
  %v18 = vld [vmem:[%s2 + $0x8] sm:$0xf]
  %v19 = vld [vmem:[%s2 + $0xc] sm:$0x1]
  %v20 = vld [vmem:[%s1] sm:$0xff]
  %22 = vset.pattern.permute.xlu0 0
  %23 = vperm.xlu0 %22, %v20
  %v24 = vpop.permute.xlu0 %23
  %v30 = vunpack.c.l.b16 %v16
  %v31 = vunpack.c.l.b16 %v17
  %v32 = vunpack.c.l.b16 %v18
  %v33 = vunpack.c.l.b16 %v19
  %v34 = vpack.c.b16 %v31, %v30
  %v35 = vpack.c.b16 %v33, %v32
  %vm37 = vcmask 203776
  %v39 = vsel %vm37, %v15, 0
  %vm41 = vcmask 1043456
  %vm42 = vcmask 1044480
  %v43 = vsel %vm41, 4294967295, 65535
  %v44 = vsel %vm42, %v43, 0
  %v46 = vand.u32 %v35, %v44
  %48 = vmatprep.subr.bf16.mxu0 0
  %49 = vmatpush1.bf16.msra.mxu0 %v34
  %50 = vmatprep.subr.bf16.mxu0 0
  %51 = vmatpush1.bf16.msra.mxu0 %v46
  %52 = vmatprep.subr.bf16.mxu0 0
  %53 = vmatpush1.bf16.msra.mxu0 0
  %54 = vmatprep.subr.bf16.mxu0 0
  %55 = vmatpush1.bf16.msra.mxu0 0
  %56 = vmatprep.subr.bf16.mxu0 0
  %57 = vmatpush1.bf16.msra.mxu0 0
  %58 = vmatprep.subr.bf16.mxu0 0
  %59 = vmatpush1.bf16.msra.mxu0 0
  %60 = vmatprep.subr.bf16.mxu0 0
  %61 = vmatpush1.bf16.msra.mxu0 0
  %62 = vmatprep.subr.bf16.mxu0 0
  %63 = vmatpush1.bf16.msra.mxu0 0
  %64 = vmatprep.subr.bf16.mxu0 0
  %65 = vmatpush1.bf16.msra.mxu0 0
  %66 = vmatprep.subr.bf16.mxu0 0
  %67 = vmatpush1.bf16.msra.mxu0 0
  %68 = vmatprep.subr.bf16.mxu0 0
  %69 = vmatpush1.bf16.msra.mxu0 0
  %70 = vmatprep.subr.bf16.mxu0 0
  %71 = vmatpush1.bf16.msra.mxu0 0
  %72 = vmatprep.subr.bf16.mxu0 0
  %73 = vmatpush1.bf16.msra.mxu0 0
  %74 = vmatprep.subr.bf16.mxu0 0
  %75 = vmatpush1.bf16.msra.mxu0 0
  %76 = vmatprep.subr.bf16.mxu0 0
  %77 = vmatpush1.bf16.msra.mxu0 0
  %78 = vmatprep.subr.bf16.mxu0 0
  %79 = vmatpush1.bf16.msra.mxu0 0
  %80 = vmatprep.mubr.bf16.mxu0 0
  %81 = vmatmul.mubr.bf16.gmra.mrb[0].mxu0 %v39
  %v82 = vpop.f32.mrb[0].mxu0
  %v83 = vadd.f32 %v24, %v82
  %v84 = vpop.f32.mrb[0].mxu0
  %v85 = vpop.f32.mrb[0].mxu0
  %v86 = vpop.f32.mrb[0].mxu0
  %87 = vdwg.mxu0
  %v88 = vmax.f32 %v83, 0.0
  %89 = vset.pattern.permute.xlu0 1
  %90 = vperm.xlu0 %89, %v20
  %v91 = vpop.permute.xlu0 %90
  %v93 = vmul.f32 %v88, %v91
  %94 = vset.pattern.permute.xlu0 2
  %95 = vperm.xlu0 %94, %v20
  %v96 = vpop.permute.xlu0 %95
  %v98 = vadd.f32 %v93, %v96
  %v99 = vpack.c.bf16 %v98, %v98
  %100 = vst [vmem:[%s3] sm:$0xf] %v99
  // Predicated region
  $region14: #{_lambda_.5} parent=0 // pred_check
    _
  $region15: #{_lambda_.5} parent=0 // pred_check_branch
    %102 = sbr.rel (0) target = $region17
  $region16: #{_lambda_.5} parent=0 // pred_region
    _
  $region17: #{_lambda_.5} parent=0 // pred_fallthru
    _
  // Predicated region
  $region18: #{_lambda_.5} parent=0 // pred_check
    _
  $region19: #{_lambda_.5} parent=0 // pred_check_branch
    %104 = sbr.rel (0) target = $region21
  $region20: #{_lambda_.5} parent=0 // pred_region
    _
  $region21: #{_lambda_.5} parent=0 // pred_fallthru
    _

// kernel: _lambda_.6
$region0: #{_lambda_.6}
  #allocation0 [shape = 'u32[]', space=smem, size = 0x4, offset = 0x4, fixed_abs, tag = 'smem constant byte address 0x4 - core index']
  #allocation1 [shape = 'u32[144,128]{1,0:T(1,128)}', space=vmem, size = 0x12000, scoped, tag = 'internal scratch']
  %s0 = inlined_call_operand.vmem [shape: bf16[16,72], index: 0, kind: input, shape index: {}]
  %s1 = inlined_call_operand.vmem [shape: f32[16,3], index: 1, kind: input, shape index: {}]
  %s2 = inlined_call_operand.vmem [shape: bf16[72,128], index: 2, kind: input, shape index: {}]
  %s3 = inlined_call_operand.vmem [shape: bf16[16,128], index: 3, kind: output, shape index: {}]
  %s4 = sld [smem:[#allocation0]]
  $region22: #{_lambda_.6} parent=0
    _
  %s6 = ssub.s32 1, %s4
  %s7 = scalar_select 0, %s6, %s4
  // Predicated region
  $region2: #{_lambda_.6} parent=0 // pred_check
    _
  $region3: #{_lambda_.6} parent=0 // pred_check_branch
    %9 = sbr.rel (0) target = $region5
  $region4: #{_lambda_.6} parent=0 // pred_region
    _
  $region5: #{_lambda_.6} parent=0 // pred_fallthru
    _
  // Predicated region
  $region6: #{_lambda_.6} parent=0 // pred_check
    _
  $region7: #{_lambda_.6} parent=0 // pred_check_branch
    %11 = sbr.rel (0) target = $region9
  $region8: #{_lambda_.6} parent=0 // pred_region
    _
  $region9: #{_lambda_.6} parent=0 // pred_fallthru
    _
  // Predicated region
  $region10: #{_lambda_.6} parent=0 // pred_check
    _
  $region11: #{_lambda_.6} parent=0 // pred_check_branch
    %13 = sbr.rel (0) target = $region13
  $region12: #{_lambda_.6} parent=0 // pred_region
    _
  $region13: #{_lambda_.6} parent=0 // pred_fallthru
    _
  %v15 = vld [vmem:[%s0] sm:$0xf]
  %v16 = vld [vmem:[%s0 + $0x4] sm:$0xf]
  %v17 = vld [vmem:[%s2] sm:$0xf]
  %v18 = vld [vmem:[%s2 + $0x4] sm:$0xf]
  %v19 = vld [vmem:[%s2 + $0x8] sm:$0xf]
  %v20 = vld [vmem:[%s2 + $0xc] sm:$0xf]
  %v21 = vld [vmem:[%s2 + $0x10] sm:$0xf]
  %v22 = vld [vmem:[%s2 + $0x14] sm:$0xf]
  %v23 = vld [vmem:[%s2 + $0x18] sm:$0xf]
  %v24 = vld [vmem:[%s2 + $0x1c] sm:$0xf]
  %v25 = vld [vmem:[%s2 + $0x20] sm:$0xf]
  %v26 = vld [vmem:[%s1] sm:$0xff]
  %v27 = vld [vmem:[%s1 + $0x8] sm:$0xff]
  %29 = vset.pattern.permute.xlu0 0
  %30 = vperm.xlu0 %29, %v26
  %v31 = vpop.permute.xlu0 %30
  %34 = vset.pattern.permute.xlu0 0
  %35 = vperm.xlu0 %34, %v27
  %v36 = vpop.permute.xlu0 %35
  %v40 = vunpack.c.l.b16 %v15
  %v41 = vunpack.c.l.b16 %v16
  %v42 = vpack.c.b16 %v41, %v40
  %v52 = vunpack.c.l.b16 %v17
  %v53 = vunpack.c.l.b16 %v18
  %v54 = vunpack.c.l.b16 %v19
  %v55 = vunpack.c.l.b16 %v20
  %v56 = vunpack.c.l.b16 %v21
  %v57 = vunpack.c.l.b16 %v22
  %v58 = vunpack.c.l.b16 %v23
  %v59 = vunpack.c.l.b16 %v24
  %v60 = vunpack.c.l.b16 %v25
  %v61 = vpack.c.b16 %v53, %v52
  %v62 = vpack.c.b16 %v55, %v54
  %v63 = vpack.c.b16 %v57, %v56
  %v64 = vpack.c.b16 %v59, %v58
  %v65 = vpack.c.b16 %v60, %v60
  %vm70 = vcmask 588800
  %v72 = vsel %vm70, %v42, 0
  %vm74 = vcmask 1043456
  %v76 = vsel %vm74, %v65, 0
  %78 = vmatprep.subr.bf16.mxu0 0
  %79 = vmatpush1.bf16.msra.mxu0 %v61
  %80 = vmatprep.subr.bf16.mxu0 0
  %81 = vmatpush1.bf16.msra.mxu0 %v62
  %82 = vmatprep.subr.bf16.mxu0 0
  %83 = vmatpush1.bf16.msra.mxu0 %v63
  %84 = vmatprep.subr.bf16.mxu0 0
  %85 = vmatpush1.bf16.msra.mxu0 %v64
  %86 = vmatprep.subr.bf16.mxu0 0
  %87 = vmatpush1.bf16.msra.mxu0 %v76
  %88 = vmatprep.subr.bf16.mxu0 0
  %89 = vmatpush1.bf16.msra.mxu0 0
  %90 = vmatprep.subr.bf16.mxu0 0
  %91 = vmatpush1.bf16.msra.mxu0 0
  %92 = vmatprep.subr.bf16.mxu0 0
  %93 = vmatpush1.bf16.msra.mxu0 0
  %94 = vmatprep.subr.bf16.mxu0 0
  %95 = vmatpush1.bf16.msra.mxu0 0
  %96 = vmatprep.subr.bf16.mxu0 0
  %97 = vmatpush1.bf16.msra.mxu0 0
  %98 = vmatprep.subr.bf16.mxu0 0
  %99 = vmatpush1.bf16.msra.mxu0 0
  %100 = vmatprep.subr.bf16.mxu0 0
  %101 = vmatpush1.bf16.msra.mxu0 0
  %102 = vmatprep.subr.bf16.mxu0 0
  %103 = vmatpush1.bf16.msra.mxu0 0
  %104 = vmatprep.subr.bf16.mxu0 0
  %105 = vmatpush1.bf16.msra.mxu0 0
  %106 = vmatprep.subr.bf16.mxu0 0
  %107 = vmatpush1.bf16.msra.mxu0 0
  %108 = vmatprep.subr.bf16.mxu0 0
  %109 = vmatpush1.bf16.msra.mxu0 0
  %110 = vmatprep.mubr.bf16.mxu0 0
  %111 = vmatmul.mubr.bf16.gmra.mrb[0].mxu0 %v72
  %v112 = vpop.f32.mrb[0].mxu0
  %v113 = vadd.f32 %v31, %v112
  %v114 = vpop.f32.mrb[0].mxu0
  %v115 = vpop.f32.mrb[0].mxu0
  %v116 = vadd.f32 %v36, %v115
  %v117 = vpop.f32.mrb[0].mxu0
  %118 = vdwg.mxu0
  %v119 = vmax.f32 %v113, 0.0
  %v120 = vmax.f32 %v116, 0.0
  %121 = vset.pattern.permute.xlu0 1
  %122 = vperm.xlu0 %121, %v26
  %v123 = vpop.permute.xlu0 %122
  %125 = vset.pattern.permute.xlu0 1
  %126 = vperm.xlu0 %125, %v27
  %v127 = vpop.permute.xlu0 %126
  %v129 = vmul.f32 %v119, %v123
  %v130 = vmul.f32 %v120, %v127
  %131 = vset.pattern.permute.xlu0 2
  %132 = vperm.xlu0 %131, %v26
  %v133 = vpop.permute.xlu0 %132
  %135 = vset.pattern.permute.xlu0 2
  %136 = vperm.xlu0 %135, %v27
  %v137 = vpop.permute.xlu0 %136
  %v139 = vadd.f32 %v129, %v133
  %v140 = vadd.f32 %v130, %v137
  %v141 = vpack.c.bf16 %v140, %v139
  %v143 = vunpack.c.l.b16 %v141
  %v144 = vunpack.c.h.b16 %v141
  %v145 = vpack.c.b16 %v143, %v143
  %v146 = vpack.c.b16 %v144, %v144
  %149 = vst [vmem:[%s3] sm:$0xf] %v145
  %150 = vst [vmem:[%s3 + $0x4] sm:$0xf] %v146
  // Predicated region
  $region14: #{_lambda_.6} parent=0 // pred_check
    _
  $region15: #{_lambda_.6} parent=0 // pred_check_branch
    %152 = sbr.rel (0) target = $region17
  $region16: #{_lambda_.6} parent=0 // pred_region
    _
  $region17: #{_lambda_.6} parent=0 // pred_fallthru
    _
  // Predicated region
  $region18: #{_lambda_.6} parent=0 // pred_check
    _
  $region19: #{_lambda_.6} parent=0 // pred_check_branch
    %154 = sbr.rel (0) target = $region21
  $region20: #{_lambda_.6} parent=0 // pred_region
    _
  $region21: #{_lambda_.6} parent=0 // pred_fallthru
    _

// kernel: _lambda_.7
$region0: #{_lambda_.7}
  #allocation0 [shape = 'u32[]', space=smem, size = 0x4, offset = 0x4, fixed_abs, tag = 'smem constant byte address 0x4 - core index']
  #allocation1 [shape = 'u32[144,128]{1,0:T(1,128)}', space=vmem, size = 0x12000, scoped, tag = 'internal scratch']
  %s0 = inlined_call_operand.vmem [shape: bf16[32,144], index: 0, kind: input, shape index: {}]
  %s1 = inlined_call_operand.vmem [shape: f32[32,3], index: 1, kind: input, shape index: {}]
  %s2 = inlined_call_operand.vmem [shape: bf16[144,128], index: 2, kind: input, shape index: {}]
  %s3 = inlined_call_operand.vmem [shape: bf16[32,128], index: 3, kind: output, shape index: {}]
  %s4 = sld [smem:[#allocation0]]
  $region22: #{_lambda_.7} parent=0
    _
  %s6 = ssub.s32 1, %s4
  %s7 = scalar_select 0, %s6, %s4
  // Predicated region
  $region2: #{_lambda_.7} parent=0 // pred_check
    _
  $region3: #{_lambda_.7} parent=0 // pred_check_branch
    %9 = sbr.rel (0) target = $region5
  $region4: #{_lambda_.7} parent=0 // pred_region
    _
  $region5: #{_lambda_.7} parent=0 // pred_fallthru
    _
  // Predicated region
  $region6: #{_lambda_.7} parent=0 // pred_check
    _
  $region7: #{_lambda_.7} parent=0 // pred_check_branch
    %11 = sbr.rel (0) target = $region9
  $region8: #{_lambda_.7} parent=0 // pred_region
    _
  $region9: #{_lambda_.7} parent=0 // pred_fallthru
    _
  // Predicated region
  $region10: #{_lambda_.7} parent=0 // pred_check
    _
  $region11: #{_lambda_.7} parent=0 // pred_check_branch
    %13 = sbr.rel (0) target = $region13
  $region12: #{_lambda_.7} parent=0 // pred_region
    _
  $region13: #{_lambda_.7} parent=0 // pred_fallthru
    _
  %v15 = vld [vmem:[%s0] sm:$0xff]
  %v16 = vld [vmem:[%s0 + $0x8] sm:$0xff]
  %v17 = vld [vmem:[%s0 + $0x10] sm:$0xff]
  %v18 = vld [vmem:[%s0 + $0x18] sm:$0xff]
  %v19 = vld [vmem:[%s2] sm:$0xf]
  %v20 = vld [vmem:[%s2 + $0x4] sm:$0xf]
  %v21 = vld [vmem:[%s2 + $0x8] sm:$0xf]
  %v22 = vld [vmem:[%s2 + $0xc] sm:$0xf]
  %v23 = vld [vmem:[%s2 + $0x10] sm:$0xf]
  %v24 = vld [vmem:[%s2 + $0x14] sm:$0xf]
  %v25 = vld [vmem:[%s2 + $0x18] sm:$0xf]
  %v26 = vld [vmem:[%s2 + $0x1c] sm:$0xf]
  %v27 = vld [vmem:[%s2 + $0x20] sm:$0xf]
  %v28 = vld [vmem:[%s2 + $0x24] sm:$0xf]
  %v29 = vld [vmem:[%s2 + $0x28] sm:$0xf]
  %v30 = vld [vmem:[%s2 + $0x2c] sm:$0xf]
  %v31 = vld [vmem:[%s2 + $0x30] sm:$0xf]
  %v32 = vld [vmem:[%s2 + $0x34] sm:$0xf]
  %v33 = vld [vmem:[%s2 + $0x38] sm:$0xf]
  %v34 = vld [vmem:[%s2 + $0x3c] sm:$0xf]
  %v35 = vld [vmem:[%s2 + $0x40] sm:$0xf]
  %v36 = vld [vmem:[%s2 + $0x44] sm:$0xf]
  %v37 = vld [vmem:[%s1] sm:$0xff]
  %v38 = vld [vmem:[%s1 + $0x8] sm:$0xff]
  %v39 = vld [vmem:[%s1 + $0x10] sm:$0xff]
  %v40 = vld [vmem:[%s1 + $0x18] sm:$0xff]
  %42 = vset.pattern.permute.xlu0 0
  %43 = vperm.xlu0 %42, %v37
  %v44 = vpop.permute.xlu0 %43
  %47 = vset.pattern.permute.xlu0 0
  %48 = vperm.xlu0 %47, %v38
  %v49 = vpop.permute.xlu0 %48
  %52 = vset.pattern.permute.xlu0 0
  %53 = vperm.xlu0 %52, %v39
  %v54 = vpop.permute.xlu0 %53
  %57 = vset.pattern.permute.xlu0 0
  %58 = vperm.xlu0 %57, %v40
  %v59 = vpop.permute.xlu0 %58
  %v65 = vunpack.c.l.b16 %v15
  %v66 = vunpack.c.h.b16 %v15
  %v67 = vunpack.c.l.b16 %v16
  %v68 = vunpack.c.h.b16 %v16
  %v69 = vunpack.c.l.b16 %v17
  %v70 = vunpack.c.h.b16 %v17
  %v71 = vunpack.c.l.b16 %v18
  %v72 = vunpack.c.h.b16 %v18
  %v73 = vpack.c.b16 %v67, %v65
  %v74 = vpack.c.b16 %v68, %v66
  %v75 = vpack.c.b16 %v71, %v69
  %v76 = vpack.c.b16 %v72, %v70
  %v97 = vunpack.c.l.b16 %v19
  %v98 = vunpack.c.l.b16 %v20
  %v99 = vunpack.c.l.b16 %v21
  %v100 = vunpack.c.l.b16 %v22
  %v101 = vunpack.c.l.b16 %v23
  %v102 = vunpack.c.l.b16 %v24
  %v103 = vunpack.c.l.b16 %v25
  %v104 = vunpack.c.l.b16 %v26
  %v105 = vunpack.c.l.b16 %v27
  %v106 = vunpack.c.l.b16 %v28
  %v107 = vunpack.c.l.b16 %v29
  %v108 = vunpack.c.l.b16 %v30
  %v109 = vunpack.c.l.b16 %v31
  %v110 = vunpack.c.l.b16 %v32
  %v111 = vunpack.c.l.b16 %v33
  %v112 = vunpack.c.l.b16 %v34
  %v113 = vunpack.c.l.b16 %v35
  %v114 = vunpack.c.l.b16 %v36
  %v115 = vpack.c.b16 %v98, %v97
  %v116 = vpack.c.b16 %v100, %v99
  %v117 = vpack.c.b16 %v102, %v101
  %v118 = vpack.c.b16 %v104, %v103
  %v119 = vpack.c.b16 %v106, %v105
  %v120 = vpack.c.b16 %v108, %v107
  %v121 = vpack.c.b16 %v110, %v109
  %v122 = vpack.c.b16 %v112, %v111
  %v123 = vpack.c.b16 %v114, %v113
  %vm133 = vcmask 130048
  %v135 = vsel %vm133, %v74, 0
  %v138 = vsel %vm133, %v76, 0
  %140 = vmatprep.subr.bf16.mxu0 0
  %141 = vmatpush1.bf16.msra.mxu0 %v115
  %142 = vmatprep.subr.bf16.mxu0 0
  %143 = vmatpush1.bf16.msra.mxu0 %v116
  %144 = vmatprep.subr.bf16.mxu0 0
  %145 = vmatpush1.bf16.msra.mxu0 %v117
  %146 = vmatprep.subr.bf16.mxu0 0
  %147 = vmatpush1.bf16.msra.mxu0 %v118
  %148 = vmatprep.subr.bf16.mxu0 0
  %149 = vmatpush1.bf16.msra.mxu0 %v119
  %150 = vmatprep.subr.bf16.mxu0 0
  %151 = vmatpush1.bf16.msra.mxu0 %v120
  %152 = vmatprep.subr.bf16.mxu0 0
  %153 = vmatpush1.bf16.msra.mxu0 %v121
  %154 = vmatprep.subr.bf16.mxu0 0
  %155 = vmatpush1.bf16.msra.mxu0 %v122
  %156 = vmatprep.subr.bf16.mxu0 0
  %157 = vmatpush1.bf16.msra.mxu0 %v123
  %158 = vmatprep.subr.bf16.mxu0 0
  %159 = vmatpush1.bf16.msra.mxu0 0
  %160 = vmatprep.subr.bf16.mxu0 0
  %161 = vmatpush1.bf16.msra.mxu0 0
  %162 = vmatprep.subr.bf16.mxu0 0
  %163 = vmatpush1.bf16.msra.mxu0 0
  %164 = vmatprep.subr.bf16.mxu0 0
  %165 = vmatpush1.bf16.msra.mxu0 0
  %166 = vmatprep.subr.bf16.mxu0 0
  %167 = vmatpush1.bf16.msra.mxu0 0
  %168 = vmatprep.subr.bf16.mxu0 0
  %169 = vmatpush1.bf16.msra.mxu0 0
  %170 = vmatprep.subr.bf16.mxu0 0
  %171 = vmatpush1.bf16.msra.mxu0 0
  %172 = vmatprep.mubr.bf16.mxu0 %v135
  %173 = vmatmul.mubr.bf16.gmra.mrb[0].mxu0 %v73
  %v174 = vpop.f32.mrb[0].mxu0
  %v175 = vadd.f32 %v44, %v174
  %v176 = vpop.f32.mrb[0].mxu0
  %v177 = vpop.f32.mrb[0].mxu0
  %v178 = vadd.f32 %v49, %v177
  %v179 = vpop.f32.mrb[0].mxu0
  %180 = vmatprep.mubr.bf16.mxu0 %v138
  %181 = vmatmul.mubr.bf16.gmra.mrb[0].mxu0 %v75
  %v182 = vpop.f32.mrb[0].mxu0
  %v183 = vadd.f32 %v54, %v182
  %v184 = vpop.f32.mrb[0].mxu0
  %v185 = vpop.f32.mrb[0].mxu0
  %v186 = vadd.f32 %v59, %v185
  %v187 = vpop.f32.mrb[0].mxu0
  %188 = vdwg.mxu0
  %v189 = vmax.f32 %v175, 0.0
  %v190 = vmax.f32 %v178, 0.0
  %v191 = vmax.f32 %v183, 0.0
  %v192 = vmax.f32 %v186, 0.0
  %193 = vset.pattern.permute.xlu0 1
  %194 = vperm.xlu0 %193, %v37
  %v195 = vpop.permute.xlu0 %194
  %197 = vset.pattern.permute.xlu0 1
  %198 = vperm.xlu0 %197, %v38
  %v199 = vpop.permute.xlu0 %198
  %201 = vset.pattern.permute.xlu0 1
  %202 = vperm.xlu0 %201, %v39
  %v203 = vpop.permute.xlu0 %202
  %205 = vset.pattern.permute.xlu0 1
  %206 = vperm.xlu0 %205, %v40
  %v207 = vpop.permute.xlu0 %206
  %v209 = vmul.f32 %v189, %v195
  %v210 = vmul.f32 %v190, %v199
  %v211 = vmul.f32 %v191, %v203
  %v212 = vmul.f32 %v192, %v207
  %213 = vset.pattern.permute.xlu0 2
  %214 = vperm.xlu0 %213, %v37
  %v215 = vpop.permute.xlu0 %214
  %217 = vset.pattern.permute.xlu0 2
  %218 = vperm.xlu0 %217, %v38
  %v219 = vpop.permute.xlu0 %218
  %221 = vset.pattern.permute.xlu0 2
  %222 = vperm.xlu0 %221, %v39
  %v223 = vpop.permute.xlu0 %222
  %225 = vset.pattern.permute.xlu0 2
  %226 = vperm.xlu0 %225, %v40
  %v227 = vpop.permute.xlu0 %226
  %v229 = vadd.f32 %v209, %v215
  %v230 = vadd.f32 %v210, %v219
  %v231 = vadd.f32 %v211, %v223
  %v232 = vadd.f32 %v212, %v227
  %v233 = vpack.c.bf16 %v230, %v229
  %v234 = vpack.c.bf16 %v232, %v231
  %v237 = vunpack.c.l.b16 %v233
  %v238 = vunpack.c.h.b16 %v233
  %v239 = vunpack.c.l.b16 %v234
  %v240 = vunpack.c.h.b16 %v234
  %v241 = vpack.c.b16 %v237, %v237
  %v242 = vpack.c.b16 %v238, %v238
  %v243 = vpack.c.b16 %v239, %v239
  %v244 = vpack.c.b16 %v240, %v240
  %249 = vst [vmem:[%s3] sm:$0xf] %v241
  %250 = vst [vmem:[%s3 + $0x4] sm:$0xf] %v242
  %251 = vst [vmem:[%s3 + $0x8] sm:$0xf] %v243
  %252 = vst [vmem:[%s3 + $0xc] sm:$0xf] %v244
  // Predicated region
  $region14: #{_lambda_.7} parent=0 // pred_check
    _
  $region15: #{_lambda_.7} parent=0 // pred_check_branch
    %254 = sbr.rel (0) target = $region17
  $region16: #{_lambda_.7} parent=0 // pred_region
    _
  $region17: #{_lambda_.7} parent=0 // pred_fallthru
    _
  // Predicated region
  $region18: #{_lambda_.7} parent=0 // pred_check
    _
  $region19: #{_lambda_.7} parent=0 // pred_check_branch
    %256 = sbr.rel (0) target = $region21
  $region20: #{_lambda_.7} parent=0 // pred_region
    _
  $region21: #{_lambda_.7} parent=0 // pred_fallthru
    _

// kernel: _lambda_.8
$region0: #{_lambda_.8}
  #allocation0 [shape = 'u32[]', space=smem, size = 0x4, offset = 0x4, fixed_abs, tag = 'smem constant byte address 0x4 - core index']
  #allocation1 [shape = 'u32[144,128]{1,0:T(1,128)}', space=vmem, size = 0x12000, scoped, tag = 'internal scratch']
  %s0 = inlined_call_operand.vmem [shape: bf16[64,288], index: 0, kind: input, shape index: {}]
  %s1 = inlined_call_operand.vmem [shape: f32[64,3], index: 1, kind: input, shape index: {}]
  %s2 = inlined_call_operand.vmem [shape: bf16[288,128], index: 2, kind: input, shape index: {}]
  %s3 = inlined_call_operand.vmem [shape: bf16[64,128], index: 3, kind: output, shape index: {}]
  %s4 = sld [smem:[#allocation0]]
  $region22: #{_lambda_.8} parent=0
    _
  %s6 = ssub.s32 1, %s4
  %s7 = scalar_select 0, %s6, %s4
  // Predicated region
  $region2: #{_lambda_.8} parent=0 // pred_check
    _
  $region3: #{_lambda_.8} parent=0 // pred_check_branch
    %9 = sbr.rel (0) target = $region5
  $region4: #{_lambda_.8} parent=0 // pred_region
    _
  $region5: #{_lambda_.8} parent=0 // pred_fallthru
    _
  // Predicated region
  $region6: #{_lambda_.8} parent=0 // pred_check
    _
  $region7: #{_lambda_.8} parent=0 // pred_check_branch
    %11 = sbr.rel (0) target = $region9
  $region8: #{_lambda_.8} parent=0 // pred_region
    _
  $region9: #{_lambda_.8} parent=0 // pred_fallthru
    _
  // Predicated region
  $region10: #{_lambda_.8} parent=0 // pred_check
    _
  $region11: #{_lambda_.8} parent=0 // pred_check_branch
    %13 = sbr.rel (0) target = $region13
  $region12: #{_lambda_.8} parent=0 // pred_region
    _
  $region13: #{_lambda_.8} parent=0 // pred_fallthru
    _
  %v15 = vld [vmem:[%s0] sm:$0xff]
  %v16 = vld [vmem:[%s0 + $0x8] sm:$0xf]
  %v17 = vld [vmem:[%s0 + $0xc] sm:$0xff]
  %v18 = vld [vmem:[%s0 + $0x14] sm:$0xf]
  %v19 = vld [vmem:[%s0 + $0x18] sm:$0xff]
  %v20 = vld [vmem:[%s0 + $0x20] sm:$0xf]
  %v21 = vld [vmem:[%s0 + $0x24] sm:$0xff]
  %v22 = vld [vmem:[%s0 + $0x2c] sm:$0xf]
  %v23 = vld [vmem:[%s0 + $0x30] sm:$0xff]
  %v24 = vld [vmem:[%s0 + $0x38] sm:$0xf]
  %v25 = vld [vmem:[%s0 + $0x3c] sm:$0xff]
  %v26 = vld [vmem:[%s0 + $0x44] sm:$0xf]
  %v27 = vld [vmem:[%s0 + $0x48] sm:$0xff]
  %v28 = vld [vmem:[%s0 + $0x50] sm:$0xf]
  %v29 = vld [vmem:[%s0 + $0x54] sm:$0xff]
  %v30 = vld [vmem:[%s0 + $0x5c] sm:$0xf]
  %v31 = vld [vmem:[%s2] sm:$0xf]
  %v32 = vld [vmem:[%s2 + $0x4] sm:$0xf]
  %v33 = vld [vmem:[%s2 + $0x8] sm:$0xf]
  %v34 = vld [vmem:[%s2 + $0xc] sm:$0xf]
  %v35 = vld [vmem:[%s2 + $0x10] sm:$0xf]
  %v36 = vld [vmem:[%s2 + $0x14] sm:$0xf]
  %v37 = vld [vmem:[%s2 + $0x18] sm:$0xf]
  %v38 = vld [vmem:[%s2 + $0x1c] sm:$0xf]
  %v39 = vld [vmem:[%s2 + $0x20] sm:$0xf]
  %v40 = vld [vmem:[%s2 + $0x24] sm:$0xf]
  %v41 = vld [vmem:[%s2 + $0x28] sm:$0xf]
  %v42 = vld [vmem:[%s2 + $0x2c] sm:$0xf]
  %v43 = vld [vmem:[%s2 + $0x30] sm:$0xf]
  %v44 = vld [vmem:[%s2 + $0x34] sm:$0xf]
  %v45 = vld [vmem:[%s2 + $0x38] sm:$0xf]
  %v46 = vld [vmem:[%s2 + $0x3c] sm:$0xf]
  %v47 = vld [vmem:[%s2 + $0x40] sm:$0xf]
  %v48 = vld [vmem:[%s2 + $0x44] sm:$0xf]
  %v49 = vld [vmem:[%s2 + $0x48] sm:$0xf]
  %v50 = vld [vmem:[%s2 + $0x4c] sm:$0xf]
  %v51 = vld [vmem:[%s2 + $0x50] sm:$0xf]
  %v52 = vld [vmem:[%s2 + $0x54] sm:$0xf]
  %v53 = vld [vmem:[%s2 + $0x58] sm:$0xf]
  %v54 = vld [vmem:[%s2 + $0x5c] sm:$0xf]
  %v55 = vld [vmem:[%s2 + $0x60] sm:$0xf]
  %v56 = vld [vmem:[%s2 + $0x64] sm:$0xf]
  %v57 = vld [vmem:[%s2 + $0x68] sm:$0xf]
  %v58 = vld [vmem:[%s2 + $0x6c] sm:$0xf]
  %v59 = vld [vmem:[%s2 + $0x70] sm:$0xf]
  %v60 = vld [vmem:[%s2 + $0x74] sm:$0xf]
  %v61 = vld [vmem:[%s2 + $0x78] sm:$0xf]
  %v62 = vld [vmem:[%s2 + $0x7c] sm:$0xf]
  %v63 = vld [vmem:[%s2 + $0x80] sm:$0xf]
  %v64 = vld [vmem:[%s2 + $0x84] sm:$0xf]
  %v65 = vld [vmem:[%s2 + $0x88] sm:$0xf]
  %v66 = vld [vmem:[%s2 + $0x8c] sm:$0xf]
  %v67 = vld [vmem:[%s1] sm:$0xff]
  %v68 = vld [vmem:[%s1 + $0x8] sm:$0xff]
  %v69 = vld [vmem:[%s1 + $0x10] sm:$0xff]
  %v70 = vld [vmem:[%s1 + $0x18] sm:$0xff]
  %v71 = vld [vmem:[%s1 + $0x20] sm:$0xff]
  %v72 = vld [vmem:[%s1 + $0x28] sm:$0xff]
  %v73 = vld [vmem:[%s1 + $0x30] sm:$0xff]
  %v74 = vld [vmem:[%s1 + $0x38] sm:$0xff]
  %76 = vset.pattern.permute.xlu0 0
  %77 = vperm.xlu0 %76, %v67
  %v78 = vpop.permute.xlu0 %77
  %81 = vset.pattern.permute.xlu0 0
  %82 = vperm.xlu0 %81, %v68
  %v83 = vpop.permute.xlu0 %82
  %86 = vset.pattern.permute.xlu0 0
  %87 = vperm.xlu0 %86, %v69
  %v88 = vpop.permute.xlu0 %87
  %91 = vset.pattern.permute.xlu0 0
  %92 = vperm.xlu0 %91, %v70
  %v93 = vpop.permute.xlu0 %92
  %96 = vset.pattern.permute.xlu0 0
  %97 = vperm.xlu0 %96, %v71
  %v98 = vpop.permute.xlu0 %97
  %101 = vset.pattern.permute.xlu0 0
  %102 = vperm.xlu0 %101, %v72
  %v103 = vpop.permute.xlu0 %102
  %106 = vset.pattern.permute.xlu0 0
  %107 = vperm.xlu0 %106, %v73
  %v108 = vpop.permute.xlu0 %107
  %111 = vset.pattern.permute.xlu0 0
  %112 = vperm.xlu0 %111, %v74
  %v113 = vpop.permute.xlu0 %112
  %v131 = vunpack.c.l.b16 %v15
  %v132 = vunpack.c.h.b16 %v15
  %v133 = vunpack.c.l.b16 %v16
  %v134 = vunpack.c.l.b16 %v17
  %v135 = vunpack.c.h.b16 %v17
  %v136 = vunpack.c.l.b16 %v18
  %v137 = vunpack.c.l.b16 %v19
  %v138 = vunpack.c.h.b16 %v19
  %v139 = vunpack.c.l.b16 %v20
  %v140 = vunpack.c.l.b16 %v21
  %v141 = vunpack.c.h.b16 %v21
  %v142 = vunpack.c.l.b16 %v22
  %v143 = vunpack.c.l.b16 %v23
  %v144 = vunpack.c.h.b16 %v23
  %v145 = vunpack.c.l.b16 %v24
  %v146 = vunpack.c.l.b16 %v25
  %v147 = vunpack.c.h.b16 %v25
  %v148 = vunpack.c.l.b16 %v26
  %v149 = vunpack.c.l.b16 %v27
  %v150 = vunpack.c.h.b16 %v27
  %v151 = vunpack.c.l.b16 %v28
  %v152 = vunpack.c.l.b16 %v29
  %v153 = vunpack.c.h.b16 %v29
  %v154 = vunpack.c.l.b16 %v30
  %v155 = vpack.c.b16 %v134, %v131
  %v156 = vpack.c.b16 %v135, %v132
  %v157 = vpack.c.b16 %v136, %v133
  %v158 = vpack.c.b16 %v140, %v137
  %v159 = vpack.c.b16 %v141, %v138
  %v160 = vpack.c.b16 %v142, %v139
  %v161 = vpack.c.b16 %v146, %v143
  %v162 = vpack.c.b16 %v147, %v144
  %v163 = vpack.c.b16 %v148, %v145
  %v164 = vpack.c.b16 %v152, %v149
  %v165 = vpack.c.b16 %v153, %v150
  %v166 = vpack.c.b16 %v154, %v151
  %v211 = vunpack.c.l.b16 %v31
  %v212 = vunpack.c.l.b16 %v32
  %v213 = vunpack.c.l.b16 %v33
  %v214 = vunpack.c.l.b16 %v34
  %v215 = vunpack.c.l.b16 %v35
  %v216 = vunpack.c.l.b16 %v36
  %v217 = vunpack.c.l.b16 %v37
  %v218 = vunpack.c.l.b16 %v38
  %v219 = vunpack.c.l.b16 %v39
  %v220 = vunpack.c.l.b16 %v40
  %v221 = vunpack.c.l.b16 %v41
  %v222 = vunpack.c.l.b16 %v42
  %v223 = vunpack.c.l.b16 %v43
  %v224 = vunpack.c.l.b16 %v44
  %v225 = vunpack.c.l.b16 %v45
  %v226 = vunpack.c.l.b16 %v46
  %v227 = vunpack.c.l.b16 %v47
  %v228 = vunpack.c.l.b16 %v48
  %v229 = vunpack.c.l.b16 %v49
  %v230 = vunpack.c.l.b16 %v50
  %v231 = vunpack.c.l.b16 %v51
  %v232 = vunpack.c.l.b16 %v52
  %v233 = vunpack.c.l.b16 %v53
  %v234 = vunpack.c.l.b16 %v54
  %v235 = vunpack.c.l.b16 %v55
  %v236 = vunpack.c.l.b16 %v56
  %v237 = vunpack.c.l.b16 %v57
  %v238 = vunpack.c.l.b16 %v58
  %v239 = vunpack.c.l.b16 %v59
  %v240 = vunpack.c.l.b16 %v60
  %v241 = vunpack.c.l.b16 %v61
  %v242 = vunpack.c.l.b16 %v62
  %v243 = vunpack.c.l.b16 %v63
  %v244 = vunpack.c.l.b16 %v64
  %v245 = vunpack.c.l.b16 %v65
  %v246 = vunpack.c.l.b16 %v66
  %v247 = vpack.c.b16 %v212, %v211
  %v248 = vpack.c.b16 %v214, %v213
  %v249 = vpack.c.b16 %v216, %v215
  %v250 = vpack.c.b16 %v218, %v217
  %v251 = vpack.c.b16 %v220, %v219
  %v252 = vpack.c.b16 %v222, %v221
  %v253 = vpack.c.b16 %v224, %v223
  %v254 = vpack.c.b16 %v226, %v225
  %v255 = vpack.c.b16 %v228, %v227
  %v256 = vpack.c.b16 %v230, %v229
  %v257 = vpack.c.b16 %v232, %v231
  %v258 = vpack.c.b16 %v234, %v233
  %v259 = vpack.c.b16 %v236, %v235
  %v260 = vpack.c.b16 %v238, %v237
  %v261 = vpack.c.b16 %v240, %v239
  %v262 = vpack.c.b16 %v242, %v241
  %v263 = vpack.c.b16 %v244, %v243
  %v264 = vpack.c.b16 %v246, %v245
  %vm283 = vcmask 261120
  %v285 = vsel %vm283, %v157, 0
  %v288 = vsel %vm283, %v160, 0
  %v291 = vsel %vm283, %v163, 0
  %v294 = vsel %vm283, %v166, 0
  %296 = vmatprep.subr.bf16.mxu0 0
  %297 = vmatpush1.bf16.msra.mxu0 %v247
  %298 = vmatprep.subr.bf16.mxu0 0
  %299 = vmatpush1.bf16.msra.mxu0 %v248
  %300 = vmatprep.subr.bf16.mxu0 0
  %301 = vmatpush1.bf16.msra.mxu0 %v249
  %302 = vmatprep.subr.bf16.mxu0 0
  %303 = vmatpush1.bf16.msra.mxu0 %v250
  %304 = vmatprep.subr.bf16.mxu0 0
  %305 = vmatpush1.bf16.msra.mxu0 %v251
  %306 = vmatprep.subr.bf16.mxu0 0
  %307 = vmatpush1.bf16.msra.mxu0 %v252
  %308 = vmatprep.subr.bf16.mxu0 0
  %309 = vmatpush1.bf16.msra.mxu0 %v253
  %310 = vmatprep.subr.bf16.mxu0 0
  %311 = vmatpush1.bf16.msra.mxu0 %v254
  %312 = vmatprep.subr.bf16.mxu0 0
  %313 = vmatpush1.bf16.msra.mxu0 %v255
  %314 = vmatprep.subr.bf16.mxu0 0
  %315 = vmatpush1.bf16.msra.mxu0 %v256
  %316 = vmatprep.subr.bf16.mxu0 0
  %317 = vmatpush1.bf16.msra.mxu0 %v257
  %318 = vmatprep.subr.bf16.mxu0 0
  %319 = vmatpush1.bf16.msra.mxu0 %v258
  %320 = vmatprep.subr.bf16.mxu0 0
  %321 = vmatpush1.bf16.msra.mxu0 %v259
  %322 = vmatprep.subr.bf16.mxu0 0
  %323 = vmatpush1.bf16.msra.mxu0 %v260
  %324 = vmatprep.subr.bf16.mxu0 0
  %325 = vmatpush1.bf16.msra.mxu0 %v261
  %326 = vmatprep.subr.bf16.mxu0 0
  %327 = vmatpush1.bf16.msra.mxu0 %v262
  %328 = vmatprep.mubr.bf16.mxu0 %v156
  %329 = vmatmul.mubr.bf16.gmra.mrb[0].mxu0 %v155
  %v330 = vpop.f32.mrb[0].mxu0
  %v331 = vadd.f32 %v78, %v330
  %v332 = vpop.f32.mrb[0].mxu0
  %v333 = vpop.f32.mrb[0].mxu0
  %v334 = vadd.f32 %v83, %v333
  %v335 = vpop.f32.mrb[0].mxu0
  %336 = vmatprep.mubr.bf16.mxu0 %v159
  %337 = vmatmul.mubr.bf16.gmra.mrb[0].mxu0 %v158
  %v338 = vpop.f32.mrb[0].mxu0
  %v339 = vadd.f32 %v88, %v338
  %v340 = vpop.f32.mrb[0].mxu0
  %v341 = vpop.f32.mrb[0].mxu0
  %v342 = vadd.f32 %v93, %v341
  %v343 = vpop.f32.mrb[0].mxu0
  %344 = vmatprep.mubr.bf16.mxu0 %v162
  %345 = vmatmul.mubr.bf16.gmra.mrb[0].mxu0 %v161
  %v346 = vpop.f32.mrb[0].mxu0
  %v347 = vadd.f32 %v98, %v346
  %v348 = vpop.f32.mrb[0].mxu0
  %v349 = vpop.f32.mrb[0].mxu0
  %v350 = vadd.f32 %v103, %v349
  %v351 = vpop.f32.mrb[0].mxu0
  %352 = vmatprep.mubr.bf16.mxu0 %v165
  %353 = vmatmul.mubr.bf16.gmra.mrb[0].mxu0 %v164
  %v354 = vpop.f32.mrb[0].mxu0
  %v355 = vadd.f32 %v108, %v354
  %v356 = vpop.f32.mrb[0].mxu0
  %v357 = vpop.f32.mrb[0].mxu0
  %v358 = vadd.f32 %v113, %v357
  %v359 = vpop.f32.mrb[0].mxu0
  %360 = vdwg.mxu0
  %361 = vmatprep.subr.bf16.mxu0 0
  %362 = vmatpush1.bf16.msra.mxu0 %v263
  %363 = vmatprep.subr.bf16.mxu0 0
  %364 = vmatpush1.bf16.msra.mxu0 %v264
  %365 = vmatprep.subr.bf16.mxu0 0
  %366 = vmatpush1.bf16.msra.mxu0 0
  %367 = vmatprep.subr.bf16.mxu0 0
  %368 = vmatpush1.bf16.msra.mxu0 0
  %369 = vmatprep.subr.bf16.mxu0 0
  %370 = vmatpush1.bf16.msra.mxu0 0
  %371 = vmatprep.subr.bf16.mxu0 0
  %372 = vmatpush1.bf16.msra.mxu0 0
  %373 = vmatprep.subr.bf16.mxu0 0
  %374 = vmatpush1.bf16.msra.mxu0 0
  %375 = vmatprep.subr.bf16.mxu0 0
  %376 = vmatpush1.bf16.msra.mxu0 0
  %377 = vmatprep.subr.bf16.mxu0 0
  %378 = vmatpush1.bf16.msra.mxu0 0
  %379 = vmatprep.subr.bf16.mxu0 0
  %380 = vmatpush1.bf16.msra.mxu0 0
  %381 = vmatprep.subr.bf16.mxu0 0
  %382 = vmatpush1.bf16.msra.mxu0 0
  %383 = vmatprep.subr.bf16.mxu0 0
  %384 = vmatpush1.bf16.msra.mxu0 0
  %385 = vmatprep.subr.bf16.mxu0 0
  %386 = vmatpush1.bf16.msra.mxu0 0
  %387 = vmatprep.subr.bf16.mxu0 0
  %388 = vmatpush1.bf16.msra.mxu0 0
  %389 = vmatprep.subr.bf16.mxu0 0
  %390 = vmatpush1.bf16.msra.mxu0 0
  %391 = vmatprep.subr.bf16.mxu0 0
  %392 = vmatpush1.bf16.msra.mxu0 0
  %393 = vmatprep.mubr.bf16.mxu0 0
  %394 = vmatmul.mubr.bf16.gmra.mrb[0].mxu0 %v285
  %v395 = vpop.f32.mrb[0].mxu0
  %v396 = vadd.f32 %v331, %v395
  %v397 = vpop.f32.mrb[0].mxu0
  %v398 = vpop.f32.mrb[0].mxu0
  %v399 = vadd.f32 %v334, %v398
  %v400 = vpop.f32.mrb[0].mxu0
  %401 = vmatprep.mubr.bf16.mxu0 0
  %402 = vmatmul.mubr.bf16.gmra.mrb[0].mxu0 %v288
  %v403 = vpop.f32.mrb[0].mxu0
  %v404 = vadd.f32 %v339, %v403
  %v405 = vpop.f32.mrb[0].mxu0
  %v406 = vpop.f32.mrb[0].mxu0
  %v407 = vadd.f32 %v342, %v406
  %v408 = vpop.f32.mrb[0].mxu0
  %409 = vmatprep.mubr.bf16.mxu0 0
  %410 = vmatmul.mubr.bf16.gmra.mrb[0].mxu0 %v291
  %v411 = vpop.f32.mrb[0].mxu0
  %v412 = vadd.f32 %v347, %v411
  %v413 = vpop.f32.mrb[0].mxu0
  %v414 = vpop.f32.mrb[0].mxu0
  %v415 = vadd.f32 %v350, %v414
  %v416 = vpop.f32.mrb[0].mxu0
  %417 = vmatprep.mubr.bf16.mxu0 0
  %418 = vmatmul.mubr.bf16.gmra.mrb[0].mxu0 %v294
  %v419 = vpop.f32.mrb[0].mxu0
  %v420 = vadd.f32 %v355, %v419
  %v421 = vpop.f32.mrb[0].mxu0
  %v422 = vpop.f32.mrb[0].mxu0
  %v423 = vadd.f32 %v358, %v422
  %v424 = vpop.f32.mrb[0].mxu0
  %425 = vdwg.mxu0
  %v426 = vmax.f32 %v396, 0.0
  %v427 = vmax.f32 %v399, 0.0
  %v428 = vmax.f32 %v404, 0.0
  %v429 = vmax.f32 %v407, 0.0
  %v430 = vmax.f32 %v412, 0.0
  %v431 = vmax.f32 %v415, 0.0
  %v432 = vmax.f32 %v420, 0.0
  %v433 = vmax.f32 %v423, 0.0
  %434 = vset.pattern.permute.xlu0 1
  %435 = vperm.xlu0 %434, %v67
  %v436 = vpop.permute.xlu0 %435
  %438 = vset.pattern.permute.xlu0 1
  %439 = vperm.xlu0 %438, %v68
  %v440 = vpop.permute.xlu0 %439
  %442 = vset.pattern.permute.xlu0 1
  %443 = vperm.xlu0 %442, %v69
  %v444 = vpop.permute.xlu0 %443
  %446 = vset.pattern.permute.xlu0 1
  %447 = vperm.xlu0 %446, %v70
  %v448 = vpop.permute.xlu0 %447
  %450 = vset.pattern.permute.xlu0 1
  %451 = vperm.xlu0 %450, %v71
  %v452 = vpop.permute.xlu0 %451
  %454 = vset.pattern.permute.xlu0 1
  %455 = vperm.xlu0 %454, %v72
  %v456 = vpop.permute.xlu0 %455
  %458 = vset.pattern.permute.xlu0 1
  %459 = vperm.xlu0 %458, %v73
  %v460 = vpop.permute.xlu0 %459
  %462 = vset.pattern.permute.xlu0 1
  %463 = vperm.xlu0 %462, %v74
  %v464 = vpop.permute.xlu0 %463
  %v466 = vmul.f32 %v426, %v436
  %v467 = vmul.f32 %v427, %v440
  %v468 = vmul.f32 %v428, %v444
  %v469 = vmul.f32 %v429, %v448
  %v470 = vmul.f32 %v430, %v452
  %v471 = vmul.f32 %v431, %v456
  %v472 = vmul.f32 %v432, %v460
  %v473 = vmul.f32 %v433, %v464
  %474 = vset.pattern.permute.xlu0 2
  %475 = vperm.xlu0 %474, %v67
  %v476 = vpop.permute.xlu0 %475
  %478 = vset.pattern.permute.xlu0 2
  %479 = vperm.xlu0 %478, %v68
  %v480 = vpop.permute.xlu0 %479
  %482 = vset.pattern.permute.xlu0 2
  %483 = vperm.xlu0 %482, %v69
  %v484 = vpop.permute.xlu0 %483
  %486 = vset.pattern.permute.xlu0 2
  %487 = vperm.xlu0 %486, %v70
  %v488 = vpop.permute.xlu0 %487
  %490 = vset.pattern.permute.xlu0 2
  %491 = vperm.xlu0 %490, %v71
  %v492 = vpop.permute.xlu0 %491
  %494 = vset.pattern.permute.xlu0 2
  %495 = vperm.xlu0 %494, %v72
  %v496 = vpop.permute.xlu0 %495
  %498 = vset.pattern.permute.xlu0 2
  %499 = vperm.xlu0 %498, %v73
  %v500 = vpop.permute.xlu0 %499
  %502 = vset.pattern.permute.xlu0 2
  %503 = vperm.xlu0 %502, %v74
  %v504 = vpop.permute.xlu0 %503
  %v506 = vadd.f32 %v466, %v476
  %v507 = vadd.f32 %v467, %v480
  %v508 = vadd.f32 %v468, %v484
  %v509 = vadd.f32 %v469, %v488
  %v510 = vadd.f32 %v470, %v492
  %v511 = vadd.f32 %v471, %v496
  %v512 = vadd.f32 %v472, %v500
  %v513 = vadd.f32 %v473, %v504
  %v514 = vpack.c.bf16 %v507, %v506
  %v515 = vpack.c.bf16 %v509, %v508
  %v516 = vpack.c.bf16 %v511, %v510
  %v517 = vpack.c.bf16 %v513, %v512
  %v522 = vunpack.c.l.b16 %v514
  %v523 = vunpack.c.h.b16 %v514
  %v524 = vunpack.c.l.b16 %v515
  %v525 = vunpack.c.h.b16 %v515
  %v526 = vunpack.c.l.b16 %v516
  %v527 = vunpack.c.h.b16 %v516
  %v528 = vunpack.c.l.b16 %v517
  %v529 = vunpack.c.h.b16 %v517
  %v530 = vpack.c.b16 %v522, %v522
  %v531 = vpack.c.b16 %v523, %v523
  %v532 = vpack.c.b16 %v524, %v524
  %v533 = vpack.c.b16 %v525, %v525
  %v534 = vpack.c.b16 %v526, %v526
  %v535 = vpack.c.b16 %v527, %v527
  %v536 = vpack.c.b16 %v528, %v528
  %v537 = vpack.c.b16 %v529, %v529
  %546 = vst [vmem:[%s3] sm:$0xf] %v530
  %547 = vst [vmem:[%s3 + $0x4] sm:$0xf] %v531
  %548 = vst [vmem:[%s3 + $0x8] sm:$0xf] %v532
  %549 = vst [vmem:[%s3 + $0xc] sm:$0xf] %v533
  %550 = vst [vmem:[%s3 + $0x10] sm:$0xf] %v534
  %551 = vst [vmem:[%s3 + $0x14] sm:$0xf] %v535
  %552 = vst [vmem:[%s3 + $0x18] sm:$0xf] %v536
  %553 = vst [vmem:[%s3 + $0x1c] sm:$0xf] %v537
  // Predicated region
  $region14: #{_lambda_.8} parent=0 // pred_check
    _
  $region15: #{_lambda_.8} parent=0 // pred_check_branch
    %555 = sbr.rel (0) target = $region17
  $region16: #{_lambda_.8} parent=0 // pred_region
    _
  $region17: #{_lambda_.8} parent=0 // pred_fallthru
    _
  // Predicated region
  $region18: #{_lambda_.8} parent=0 // pred_check
    _
  $region19: #{_lambda_.8} parent=0 // pred_check_branch
    %557 = sbr.rel (0) target = $region21
  $region20: #{_lambda_.8} parent=0 // pred_region
    _
  $region21: #{_lambda_.8} parent=0 // pred_fallthru
    _

// kernel: _lambda_.9
$region0: #{_lambda_.9}
  #allocation0 [shape = 'u32[]', space=smem, size = 0x4, offset = 0x4, fixed_abs, tag = 'smem constant byte address 0x4 - core index']
  #allocation1 [shape = 'u32[144,128]{1,0:T(1,128)}', space=vmem, size = 0x12000, scoped, tag = 'internal scratch']
  %s0 = inlined_call_operand.vmem [shape: bf16[64,2,1], index: 0, kind: input, shape index: {}]
  %s1 = inlined_call_operand.vmem [shape: f32[10,64], index: 1, kind: input, shape index: {}]
  %s2 = inlined_call_operand.vmem [shape: f32[1,10], index: 2, kind: input, shape index: {}]
  %s3 = inlined_call_operand.hbm [shape: f32[2,10], index: 3, kind: output, shape index: {}]
  %s4 = sld [smem:[#allocation0]]
  $region22: #{_lambda_.9} parent=0
    _
  %s6 = ssub.s32 1, %s4
  %s7 = scalar_select 0, %s6, %s4
  $region1: #{_lambda_.9} parent=0
    #allocation2 [shape = 'u8[1024]{0}', space=vmem, size = 0x400, scoped, tag = 'output window, operand 0, single buffered']
    #allocation3 [shape = 's32[1]{0}', space=sflag, size = 0x4, scoped, tag = 'scoped memory for _lambda_.9']
    %8 = vsyncpa [#allocation3], 0
    // Predicated region
    $region2: #{_lambda_.9} parent=1 // pred_check
      _
    $region3: #{_lambda_.9} parent=1 // pred_check_branch
      %10 = sbr.rel (0) target = $region5
    $region4: #{_lambda_.9} parent=1 // pred_region
      _
    $region5: #{_lambda_.9} parent=1 // pred_fallthru
      _
    // Predicated region
    $region6: #{_lambda_.9} parent=1 // pred_check
      _
    $region7: #{_lambda_.9} parent=1 // pred_check_branch
      %12 = sbr.rel (0) target = $region9
    $region8: #{_lambda_.9} parent=1 // pred_region
      _
    $region9: #{_lambda_.9} parent=1 // pred_fallthru
      _
    // Predicated region
    $region10: #{_lambda_.9} parent=1 // pred_check
      _
    $region11: #{_lambda_.9} parent=1 // pred_check_branch
      %14 = sbr.rel (0) target = $region13
    $region12: #{_lambda_.9} parent=1 // pred_region
      _
    $region13: #{_lambda_.9} parent=1 // pred_fallthru
      _
    %v15 = vld [vmem:[%s0] sm:$0x1]
    %v16 = vld [vmem:[%s0 + $0x1] sm:$0x1]
    %v17 = vld [vmem:[%s0 + $0x2] sm:$0x1]
    %v18 = vld [vmem:[%s0 + $0x3] sm:$0x1]
    %v19 = vld [vmem:[%s0 + $0x4] sm:$0x1]
    %v20 = vld [vmem:[%s0 + $0x5] sm:$0x1]
    %v21 = vld [vmem:[%s0 + $0x6] sm:$0x1]
    %v22 = vld [vmem:[%s0 + $0x7] sm:$0x1]
    %v23 = vld [vmem:[%s0 + $0x8] sm:$0x1]
    %v24 = vld [vmem:[%s0 + $0x9] sm:$0x1]
    %v25 = vld [vmem:[%s0 + $0xa] sm:$0x1]
    %v26 = vld [vmem:[%s0 + $0xb] sm:$0x1]
    %v27 = vld [vmem:[%s0 + $0xc] sm:$0x1]
    %v28 = vld [vmem:[%s0 + $0xd] sm:$0x1]
    %v29 = vld [vmem:[%s0 + $0xe] sm:$0x1]
    %v30 = vld [vmem:[%s0 + $0xf] sm:$0x1]
    %v31 = vld [vmem:[%s0 + $0x10] sm:$0x1]
    %v32 = vld [vmem:[%s0 + $0x11] sm:$0x1]
    %v33 = vld [vmem:[%s0 + $0x12] sm:$0x1]
    %v34 = vld [vmem:[%s0 + $0x13] sm:$0x1]
    %v35 = vld [vmem:[%s0 + $0x14] sm:$0x1]
    %v36 = vld [vmem:[%s0 + $0x15] sm:$0x1]
    %v37 = vld [vmem:[%s0 + $0x16] sm:$0x1]
    %v38 = vld [vmem:[%s0 + $0x17] sm:$0x1]
    %v39 = vld [vmem:[%s0 + $0x18] sm:$0x1]
    %v40 = vld [vmem:[%s0 + $0x19] sm:$0x1]
    %v41 = vld [vmem:[%s0 + $0x1a] sm:$0x1]
    %v42 = vld [vmem:[%s0 + $0x1b] sm:$0x1]
    %v43 = vld [vmem:[%s0 + $0x1c] sm:$0x1]
    %v44 = vld [vmem:[%s0 + $0x1d] sm:$0x1]
    %v45 = vld [vmem:[%s0 + $0x1e] sm:$0x1]
    %v46 = vld [vmem:[%s0 + $0x1f] sm:$0x1]
    %v47 = vld [vmem:[%s0 + $0x20] sm:$0x1]
    %v48 = vld [vmem:[%s0 + $0x21] sm:$0x1]
    %v49 = vld [vmem:[%s0 + $0x22] sm:$0x1]
    %v50 = vld [vmem:[%s0 + $0x23] sm:$0x1]
    %v51 = vld [vmem:[%s0 + $0x24] sm:$0x1]
    %v52 = vld [vmem:[%s0 + $0x25] sm:$0x1]
    %v53 = vld [vmem:[%s0 + $0x26] sm:$0x1]
    %v54 = vld [vmem:[%s0 + $0x27] sm:$0x1]
    %v55 = vld [vmem:[%s0 + $0x28] sm:$0x1]
    %v56 = vld [vmem:[%s0 + $0x29] sm:$0x1]
    %v57 = vld [vmem:[%s0 + $0x2a] sm:$0x1]
    %v58 = vld [vmem:[%s0 + $0x2b] sm:$0x1]
    %v59 = vld [vmem:[%s0 + $0x2c] sm:$0x1]
    %v60 = vld [vmem:[%s0 + $0x2d] sm:$0x1]
    %v61 = vld [vmem:[%s0 + $0x2e] sm:$0x1]
    %v62 = vld [vmem:[%s0 + $0x2f] sm:$0x1]
    %v63 = vld [vmem:[%s0 + $0x30] sm:$0x1]
    %v64 = vld [vmem:[%s0 + $0x31] sm:$0x1]
    %v65 = vld [vmem:[%s0 + $0x32] sm:$0x1]
    %v66 = vld [vmem:[%s0 + $0x33] sm:$0x1]
    %v67 = vld [vmem:[%s0 + $0x34] sm:$0x1]
    %v68 = vld [vmem:[%s0 + $0x35] sm:$0x1]
    %v69 = vld [vmem:[%s0 + $0x36] sm:$0x1]
    %v70 = vld [vmem:[%s0 + $0x37] sm:$0x1]
    %v71 = vld [vmem:[%s0 + $0x38] sm:$0x1]
    %v72 = vld [vmem:[%s0 + $0x39] sm:$0x1]
    %v73 = vld [vmem:[%s0 + $0x3a] sm:$0x1]
    %v74 = vld [vmem:[%s0 + $0x3b] sm:$0x1]
    %v75 = vld [vmem:[%s0 + $0x3c] sm:$0x1]
    %v76 = vld [vmem:[%s0 + $0x3d] sm:$0x1]
    %v77 = vld [vmem:[%s0 + $0x3e] sm:$0x1]
    %v78 = vld [vmem:[%s0 + $0x3f] sm:$0x1]
    %v79 = vunpack.c.l.bf16 %v15
    %v80 = vunpack.c.l.bf16 %v16
    %v81 = vunpack.c.l.bf16 %v17
    %v82 = vunpack.c.l.bf16 %v18
    %v83 = vunpack.c.l.bf16 %v19
    %v84 = vunpack.c.l.bf16 %v20
    %v85 = vunpack.c.l.bf16 %v21
    %v86 = vunpack.c.l.bf16 %v22
    %v87 = vunpack.c.l.bf16 %v23
    %v88 = vunpack.c.l.bf16 %v24
    %v89 = vunpack.c.l.bf16 %v25
    %v90 = vunpack.c.l.bf16 %v26
    %v91 = vunpack.c.l.bf16 %v27
    %v92 = vunpack.c.l.bf16 %v28
    %v93 = vunpack.c.l.bf16 %v29
    %v94 = vunpack.c.l.bf16 %v30
    %v95 = vunpack.c.l.bf16 %v31
    %v96 = vunpack.c.l.bf16 %v32
    %v97 = vunpack.c.l.bf16 %v33
    %v98 = vunpack.c.l.bf16 %v34
    %v99 = vunpack.c.l.bf16 %v35
    %v100 = vunpack.c.l.bf16 %v36
    %v101 = vunpack.c.l.bf16 %v37
    %v102 = vunpack.c.l.bf16 %v38
    %v103 = vunpack.c.l.bf16 %v39
    %v104 = vunpack.c.l.bf16 %v40
    %v105 = vunpack.c.l.bf16 %v41
    %v106 = vunpack.c.l.bf16 %v42
    %v107 = vunpack.c.l.bf16 %v43
    %v108 = vunpack.c.l.bf16 %v44
    %v109 = vunpack.c.l.bf16 %v45
    %v110 = vunpack.c.l.bf16 %v46
    %v111 = vunpack.c.l.bf16 %v47
    %v112 = vunpack.c.l.bf16 %v48
    %v113 = vunpack.c.l.bf16 %v49
    %v114 = vunpack.c.l.bf16 %v50
    %v115 = vunpack.c.l.bf16 %v51
    %v116 = vunpack.c.l.bf16 %v52
    %v117 = vunpack.c.l.bf16 %v53
    %v118 = vunpack.c.l.bf16 %v54
    %v119 = vunpack.c.l.bf16 %v55
    %v120 = vunpack.c.l.bf16 %v56
    %v121 = vunpack.c.l.bf16 %v57
    %v122 = vunpack.c.l.bf16 %v58
    %v123 = vunpack.c.l.bf16 %v59
    %v124 = vunpack.c.l.bf16 %v60
    %v125 = vunpack.c.l.bf16 %v61
    %v126 = vunpack.c.l.bf16 %v62
    %v127 = vunpack.c.l.bf16 %v63
    %v128 = vunpack.c.l.bf16 %v64
    %v129 = vunpack.c.l.bf16 %v65
    %v130 = vunpack.c.l.bf16 %v66
    %v131 = vunpack.c.l.bf16 %v67
    %v132 = vunpack.c.l.bf16 %v68
    %v133 = vunpack.c.l.bf16 %v69
    %v134 = vunpack.c.l.bf16 %v70
    %v135 = vunpack.c.l.bf16 %v71
    %v136 = vunpack.c.l.bf16 %v72
    %v137 = vunpack.c.l.bf16 %v73
    %v138 = vunpack.c.l.bf16 %v74
    %v139 = vunpack.c.l.bf16 %v75
    %v140 = vunpack.c.l.bf16 %v76
    %v141 = vunpack.c.l.bf16 %v77
    %v142 = vunpack.c.l.bf16 %v78
    %v143 = vadd.f32 %v79, 0.0
    %v144 = vadd.f32 %v80, 0.0
    %v145 = vadd.f32 %v81, 0.0
    %v146 = vadd.f32 %v82, 0.0
    %v147 = vadd.f32 %v83, 0.0
    %v148 = vadd.f32 %v84, 0.0
    %v149 = vadd.f32 %v85, 0.0
    %v150 = vadd.f32 %v86, 0.0
    %v151 = vadd.f32 %v87, 0.0
    %v152 = vadd.f32 %v88, 0.0
    %v153 = vadd.f32 %v89, 0.0
    %v154 = vadd.f32 %v90, 0.0
    %v155 = vadd.f32 %v91, 0.0
    %v156 = vadd.f32 %v92, 0.0
    %v157 = vadd.f32 %v93, 0.0
    %v158 = vadd.f32 %v94, 0.0
    %v159 = vadd.f32 %v95, 0.0
    %v160 = vadd.f32 %v96, 0.0
    %v161 = vadd.f32 %v97, 0.0
    %v162 = vadd.f32 %v98, 0.0
    %v163 = vadd.f32 %v99, 0.0
    %v164 = vadd.f32 %v100, 0.0
    %v165 = vadd.f32 %v101, 0.0
    %v166 = vadd.f32 %v102, 0.0
    %v167 = vadd.f32 %v103, 0.0
    %v168 = vadd.f32 %v104, 0.0
    %v169 = vadd.f32 %v105, 0.0
    %v170 = vadd.f32 %v106, 0.0
    %v171 = vadd.f32 %v107, 0.0
    %v172 = vadd.f32 %v108, 0.0
    %v173 = vadd.f32 %v109, 0.0
    %v174 = vadd.f32 %v110, 0.0
    %v175 = vadd.f32 %v111, 0.0
    %v176 = vadd.f32 %v112, 0.0
    %v177 = vadd.f32 %v113, 0.0
    %v178 = vadd.f32 %v114, 0.0
    %v179 = vadd.f32 %v115, 0.0
    %v180 = vadd.f32 %v116, 0.0
    %v181 = vadd.f32 %v117, 0.0
    %v182 = vadd.f32 %v118, 0.0
    %v183 = vadd.f32 %v119, 0.0
    %v184 = vadd.f32 %v120, 0.0
    %v185 = vadd.f32 %v121, 0.0
    %v186 = vadd.f32 %v122, 0.0
    %v187 = vadd.f32 %v123, 0.0
    %v188 = vadd.f32 %v124, 0.0
    %v189 = vadd.f32 %v125, 0.0
    %v190 = vadd.f32 %v126, 0.0
    %v191 = vadd.f32 %v127, 0.0
    %v192 = vadd.f32 %v128, 0.0
    %v193 = vadd.f32 %v129, 0.0
    %v194 = vadd.f32 %v130, 0.0
    %v195 = vadd.f32 %v131, 0.0
    %v196 = vadd.f32 %v132, 0.0
    %v197 = vadd.f32 %v133, 0.0
    %v198 = vadd.f32 %v134, 0.0
    %v199 = vadd.f32 %v135, 0.0
    %v200 = vadd.f32 %v136, 0.0
    %v201 = vadd.f32 %v137, 0.0
    %v202 = vadd.f32 %v138, 0.0
    %v203 = vadd.f32 %v139, 0.0
    %v204 = vadd.f32 %v140, 0.0
    %v205 = vadd.f32 %v141, 0.0
    %v206 = vadd.f32 %v142, 0.0
    %v207 = vld [vmem:[%s1] sm:$0xff]
    %v208 = vld [vmem:[%s1 + $0x8] sm:$0x3]
    %v209 = vld [vmem:[%s2] sm:$0x1]
    %v211 = vlaneseq
    %v212 = vshrl.u32 %v211, 7
    %v213 = vsub.s32 0, %v212
    %v214 = vrot.slane %v209, %v213
    %v281 = vunpack.c.l.s4 1983009808
    %v282 = vunpack.c.0.s8 %v281
    %v283 = vlaneseq
    %v284 = vshrl.u32 %v283, 7
    %v285 = vsub.s32 %v282, %v284
    %v286 = vrot.slane %v143, %v285
    %v288 = vunpack.c.l.s4 1983009808
    %v289 = vunpack.c.0.s8 %v288
    %v290 = vlaneseq
    %v291 = vshrl.u32 %v290, 7
    %v292 = vsub.s32 %v289, %v291
    %v293 = vrot.slane %v144, %v292
    %v295 = vunpack.c.l.s4 1983009808
    %v296 = vunpack.c.0.s8 %v295
    %v297 = vlaneseq
    %v298 = vshrl.u32 %v297, 7
    %v299 = vsub.s32 %v296, %v298
    %v300 = vrot.slane %v145, %v299
    %v302 = vunpack.c.l.s4 1983009808
    %v303 = vunpack.c.0.s8 %v302
    %v304 = vlaneseq
    %v305 = vshrl.u32 %v304, 7
    %v306 = vsub.s32 %v303, %v305
    %v307 = vrot.slane %v146, %v306
    %v309 = vunpack.c.l.s4 1983009808
    %v310 = vunpack.c.0.s8 %v309
    %v311 = vlaneseq
    %v312 = vshrl.u32 %v311, 7
    %v313 = vsub.s32 %v310, %v312
    %v314 = vrot.slane %v147, %v313
    %v316 = vunpack.c.l.s4 1983009808
    %v317 = vunpack.c.0.s8 %v316
    %v318 = vlaneseq
    %v319 = vshrl.u32 %v318, 7
    %v320 = vsub.s32 %v317, %v319
    %v321 = vrot.slane %v148, %v320
    %v323 = vunpack.c.l.s4 1983009808
    %v324 = vunpack.c.0.s8 %v323
    %v325 = vlaneseq
    %v326 = vshrl.u32 %v325, 7
    %v327 = vsub.s32 %v324, %v326
    %v328 = vrot.slane %v149, %v327
    %v330 = vunpack.c.l.s4 1983009808
    %v331 = vunpack.c.0.s8 %v330
    %v332 = vlaneseq
    %v333 = vshrl.u32 %v332, 7
    %v334 = vsub.s32 %v331, %v333
    %v335 = vrot.slane %v150, %v334
    %v337 = vunpack.c.l.s4 1983009808
    %v338 = vunpack.c.0.s8 %v337
    %v339 = vlaneseq
    %v340 = vshrl.u32 %v339, 7
    %v341 = vsub.s32 %v338, %v340
    %v342 = vrot.slane %v151, %v341
    %v344 = vunpack.c.l.s4 1983009808
    %v345 = vunpack.c.0.s8 %v344
    %v346 = vlaneseq
    %v347 = vshrl.u32 %v346, 7
    %v348 = vsub.s32 %v345, %v347
    %v349 = vrot.slane %v152, %v348
    %v351 = vunpack.c.l.s4 1983009808
    %v352 = vunpack.c.0.s8 %v351
    %v353 = vlaneseq
    %v354 = vshrl.u32 %v353, 7
    %v355 = vsub.s32 %v352, %v354
    %v356 = vrot.slane %v153, %v355
    %v358 = vunpack.c.l.s4 1983009808
    %v359 = vunpack.c.0.s8 %v358
    %v360 = vlaneseq
    %v361 = vshrl.u32 %v360, 7
    %v362 = vsub.s32 %v359, %v361
    %v363 = vrot.slane %v154, %v362
    %v365 = vunpack.c.l.s4 1983009808
    %v366 = vunpack.c.0.s8 %v365
    %v367 = vlaneseq
    %v368 = vshrl.u32 %v367, 7
    %v369 = vsub.s32 %v366, %v368
    %v370 = vrot.slane %v155, %v369
    %v372 = vunpack.c.l.s4 1983009808
    %v373 = vunpack.c.0.s8 %v372
    %v374 = vlaneseq
    %v375 = vshrl.u32 %v374, 7
    %v376 = vsub.s32 %v373, %v375
    %v377 = vrot.slane %v156, %v376
    %v379 = vunpack.c.l.s4 1983009808
    %v380 = vunpack.c.0.s8 %v379
    %v381 = vlaneseq
    %v382 = vshrl.u32 %v381, 7
    %v383 = vsub.s32 %v380, %v382
    %v384 = vrot.slane %v157, %v383
    %v386 = vunpack.c.l.s4 1983009808
    %v387 = vunpack.c.0.s8 %v386
    %v388 = vlaneseq
    %v389 = vshrl.u32 %v388, 7
    %v390 = vsub.s32 %v387, %v389
    %v391 = vrot.slane %v158, %v390
    %v393 = vunpack.c.l.s4 1983009808
    %v394 = vunpack.c.0.s8 %v393
    %v395 = vlaneseq
    %v396 = vshrl.u32 %v395, 7
    %v397 = vsub.s32 %v394, %v396
    %v398 = vrot.slane %v159, %v397
    %v400 = vunpack.c.l.s4 1983009808
    %v401 = vunpack.c.0.s8 %v400
    %v402 = vlaneseq
    %v403 = vshrl.u32 %v402, 7
    %v404 = vsub.s32 %v401, %v403
    %v405 = vrot.slane %v160, %v404
    %v407 = vunpack.c.l.s4 1983009808
    %v408 = vunpack.c.0.s8 %v407
    %v409 = vlaneseq
    %v410 = vshrl.u32 %v409, 7
    %v411 = vsub.s32 %v408, %v410
    %v412 = vrot.slane %v161, %v411
    %v414 = vunpack.c.l.s4 1983009808
    %v415 = vunpack.c.0.s8 %v414
    %v416 = vlaneseq
    %v417 = vshrl.u32 %v416, 7
    %v418 = vsub.s32 %v415, %v417
    %v419 = vrot.slane %v162, %v418
    %v421 = vunpack.c.l.s4 1983009808
    %v422 = vunpack.c.0.s8 %v421
    %v423 = vlaneseq
    %v424 = vshrl.u32 %v423, 7
    %v425 = vsub.s32 %v422, %v424
    %v426 = vrot.slane %v163, %v425
    %v428 = vunpack.c.l.s4 1983009808
    %v429 = vunpack.c.0.s8 %v428
    %v430 = vlaneseq
    %v431 = vshrl.u32 %v430, 7
    %v432 = vsub.s32 %v429, %v431
    %v433 = vrot.slane %v164, %v432
    %v435 = vunpack.c.l.s4 1983009808
    %v436 = vunpack.c.0.s8 %v435
    %v437 = vlaneseq
    %v438 = vshrl.u32 %v437, 7
    %v439 = vsub.s32 %v436, %v438
    %v440 = vrot.slane %v165, %v439
    %v442 = vunpack.c.l.s4 1983009808
    %v443 = vunpack.c.0.s8 %v442
    %v444 = vlaneseq
    %v445 = vshrl.u32 %v444, 7
    %v446 = vsub.s32 %v443, %v445
    %v447 = vrot.slane %v166, %v446
    %v449 = vunpack.c.l.s4 1983009808
    %v450 = vunpack.c.0.s8 %v449
    %v451 = vlaneseq
    %v452 = vshrl.u32 %v451, 7
    %v453 = vsub.s32 %v450, %v452
    %v454 = vrot.slane %v167, %v453
    %v456 = vunpack.c.l.s4 1983009808
    %v457 = vunpack.c.0.s8 %v456
    %v458 = vlaneseq
    %v459 = vshrl.u32 %v458, 7
    %v460 = vsub.s32 %v457, %v459
    %v461 = vrot.slane %v168, %v460
    %v463 = vunpack.c.l.s4 1983009808
    %v464 = vunpack.c.0.s8 %v463
    %v465 = vlaneseq
    %v466 = vshrl.u32 %v465, 7
    %v467 = vsub.s32 %v464, %v466
    %v468 = vrot.slane %v169, %v467
    %v470 = vunpack.c.l.s4 1983009808
    %v471 = vunpack.c.0.s8 %v470
    %v472 = vlaneseq
    %v473 = vshrl.u32 %v472, 7
    %v474 = vsub.s32 %v471, %v473
    %v475 = vrot.slane %v170, %v474
    %v477 = vunpack.c.l.s4 1983009808
    %v478 = vunpack.c.0.s8 %v477
    %v479 = vlaneseq
    %v480 = vshrl.u32 %v479, 7
    %v481 = vsub.s32 %v478, %v480
    %v482 = vrot.slane %v171, %v481
    %v484 = vunpack.c.l.s4 1983009808
    %v485 = vunpack.c.0.s8 %v484
    %v486 = vlaneseq
    %v487 = vshrl.u32 %v486, 7
    %v488 = vsub.s32 %v485, %v487
    %v489 = vrot.slane %v172, %v488
    %v491 = vunpack.c.l.s4 1983009808
    %v492 = vunpack.c.0.s8 %v491
    %v493 = vlaneseq
    %v494 = vshrl.u32 %v493, 7
    %v495 = vsub.s32 %v492, %v494
    %v496 = vrot.slane %v173, %v495
    %v498 = vunpack.c.l.s4 1983009808
    %v499 = vunpack.c.0.s8 %v498
    %v500 = vlaneseq
    %v501 = vshrl.u32 %v500, 7
    %v502 = vsub.s32 %v499, %v501
    %v503 = vrot.slane %v174, %v502
    %v505 = vunpack.c.l.s4 1983009808
    %v506 = vunpack.c.0.s8 %v505
    %v507 = vlaneseq
    %v508 = vshrl.u32 %v507, 7
    %v509 = vsub.s32 %v506, %v508
    %v510 = vrot.slane %v175, %v509
    %v512 = vunpack.c.l.s4 1983009808
    %v513 = vunpack.c.0.s8 %v512
    %v514 = vlaneseq
    %v515 = vshrl.u32 %v514, 7
    %v516 = vsub.s32 %v513, %v515
    %v517 = vrot.slane %v176, %v516
    %v519 = vunpack.c.l.s4 1983009808
    %v520 = vunpack.c.0.s8 %v519
    %v521 = vlaneseq
    %v522 = vshrl.u32 %v521, 7
    %v523 = vsub.s32 %v520, %v522
    %v524 = vrot.slane %v177, %v523
    %v526 = vunpack.c.l.s4 1983009808
    %v527 = vunpack.c.0.s8 %v526
    %v528 = vlaneseq
    %v529 = vshrl.u32 %v528, 7
    %v530 = vsub.s32 %v527, %v529
    %v531 = vrot.slane %v178, %v530
    %v533 = vunpack.c.l.s4 1983009808
    %v534 = vunpack.c.0.s8 %v533
    %v535 = vlaneseq
    %v536 = vshrl.u32 %v535, 7
    %v537 = vsub.s32 %v534, %v536
    %v538 = vrot.slane %v179, %v537
    %v540 = vunpack.c.l.s4 1983009808
    %v541 = vunpack.c.0.s8 %v540
    %v542 = vlaneseq
    %v543 = vshrl.u32 %v542, 7
    %v544 = vsub.s32 %v541, %v543
    %v545 = vrot.slane %v180, %v544
    %v547 = vunpack.c.l.s4 1983009808
    %v548 = vunpack.c.0.s8 %v547
    %v549 = vlaneseq
    %v550 = vshrl.u32 %v549, 7
    %v551 = vsub.s32 %v548, %v550
    %v552 = vrot.slane %v181, %v551
    %v554 = vunpack.c.l.s4 1983009808
    %v555 = vunpack.c.0.s8 %v554
    %v556 = vlaneseq
    %v557 = vshrl.u32 %v556, 7
    %v558 = vsub.s32 %v555, %v557
    %v559 = vrot.slane %v182, %v558
    %v561 = vunpack.c.l.s4 1983009808
    %v562 = vunpack.c.0.s8 %v561
    %v563 = vlaneseq
    %v564 = vshrl.u32 %v563, 7
    %v565 = vsub.s32 %v562, %v564
    %v566 = vrot.slane %v183, %v565
    %v568 = vunpack.c.l.s4 1983009808
    %v569 = vunpack.c.0.s8 %v568
    %v570 = vlaneseq
    %v571 = vshrl.u32 %v570, 7
    %v572 = vsub.s32 %v569, %v571
    %v573 = vrot.slane %v184, %v572
    %v575 = vunpack.c.l.s4 1983009808
    %v576 = vunpack.c.0.s8 %v575
    %v577 = vlaneseq
    %v578 = vshrl.u32 %v577, 7
    %v579 = vsub.s32 %v576, %v578
    %v580 = vrot.slane %v185, %v579
    %v582 = vunpack.c.l.s4 1983009808
    %v583 = vunpack.c.0.s8 %v582
    %v584 = vlaneseq
    %v585 = vshrl.u32 %v584, 7
    %v586 = vsub.s32 %v583, %v585
    %v587 = vrot.slane %v186, %v586
    %v589 = vunpack.c.l.s4 1983009808
    %v590 = vunpack.c.0.s8 %v589
    %v591 = vlaneseq
    %v592 = vshrl.u32 %v591, 7
    %v593 = vsub.s32 %v590, %v592
    %v594 = vrot.slane %v187, %v593
    %v596 = vunpack.c.l.s4 1983009808
    %v597 = vunpack.c.0.s8 %v596
    %v598 = vlaneseq
    %v599 = vshrl.u32 %v598, 7
    %v600 = vsub.s32 %v597, %v599
    %v601 = vrot.slane %v188, %v600
    %v603 = vunpack.c.l.s4 1983009808
    %v604 = vunpack.c.0.s8 %v603
    %v605 = vlaneseq
    %v606 = vshrl.u32 %v605, 7
    %v607 = vsub.s32 %v604, %v606
    %v608 = vrot.slane %v189, %v607
    %v610 = vunpack.c.l.s4 1983009808
    %v611 = vunpack.c.0.s8 %v610
    %v612 = vlaneseq
    %v613 = vshrl.u32 %v612, 7
    %v614 = vsub.s32 %v611, %v613
    %v615 = vrot.slane %v190, %v614
    %v617 = vunpack.c.l.s4 1983009808
    %v618 = vunpack.c.0.s8 %v617
    %v619 = vlaneseq
    %v620 = vshrl.u32 %v619, 7
    %v621 = vsub.s32 %v618, %v620
    %v622 = vrot.slane %v191, %v621
    %v624 = vunpack.c.l.s4 1983009808
    %v625 = vunpack.c.0.s8 %v624
    %v626 = vlaneseq
    %v627 = vshrl.u32 %v626, 7
    %v628 = vsub.s32 %v625, %v627
    %v629 = vrot.slane %v192, %v628
    %v631 = vunpack.c.l.s4 1983009808
    %v632 = vunpack.c.0.s8 %v631
    %v633 = vlaneseq
    %v634 = vshrl.u32 %v633, 7
    %v635 = vsub.s32 %v632, %v634
    %v636 = vrot.slane %v193, %v635
    %v638 = vunpack.c.l.s4 1983009808
    %v639 = vunpack.c.0.s8 %v638
    %v640 = vlaneseq
    %v641 = vshrl.u32 %v640, 7
    %v642 = vsub.s32 %v639, %v641
    %v643 = vrot.slane %v194, %v642
    %v645 = vunpack.c.l.s4 1983009808
    %v646 = vunpack.c.0.s8 %v645
    %v647 = vlaneseq
    %v648 = vshrl.u32 %v647, 7
    %v649 = vsub.s32 %v646, %v648
    %v650 = vrot.slane %v195, %v649
    %v652 = vunpack.c.l.s4 1983009808
    %v653 = vunpack.c.0.s8 %v652
    %v654 = vlaneseq
    %v655 = vshrl.u32 %v654, 7
    %v656 = vsub.s32 %v653, %v655
    %v657 = vrot.slane %v196, %v656
    %v659 = vunpack.c.l.s4 1983009808
    %v660 = vunpack.c.0.s8 %v659
    %v661 = vlaneseq
    %v662 = vshrl.u32 %v661, 7
    %v663 = vsub.s32 %v660, %v662
    %v664 = vrot.slane %v197, %v663
    %v666 = vunpack.c.l.s4 1983009808
    %v667 = vunpack.c.0.s8 %v666
    %v668 = vlaneseq
    %v669 = vshrl.u32 %v668, 7
    %v670 = vsub.s32 %v667, %v669
    %v671 = vrot.slane %v198, %v670
    %v673 = vunpack.c.l.s4 1983009808
    %v674 = vunpack.c.0.s8 %v673
    %v675 = vlaneseq
    %v676 = vshrl.u32 %v675, 7
    %v677 = vsub.s32 %v674, %v676
    %v678 = vrot.slane %v199, %v677
    %v680 = vunpack.c.l.s4 1983009808
    %v681 = vunpack.c.0.s8 %v680
    %v682 = vlaneseq
    %v683 = vshrl.u32 %v682, 7
    %v684 = vsub.s32 %v681, %v683
    %v685 = vrot.slane %v200, %v684
    %v687 = vunpack.c.l.s4 1983009808
    %v688 = vunpack.c.0.s8 %v687
    %v689 = vlaneseq
    %v690 = vshrl.u32 %v689, 7
    %v691 = vsub.s32 %v688, %v690
    %v692 = vrot.slane %v201, %v691
    %v694 = vunpack.c.l.s4 1983009808
    %v695 = vunpack.c.0.s8 %v694
    %v696 = vlaneseq
    %v697 = vshrl.u32 %v696, 7
    %v698 = vsub.s32 %v695, %v697
    %v699 = vrot.slane %v202, %v698
    %v701 = vunpack.c.l.s4 1983009808
    %v702 = vunpack.c.0.s8 %v701
    %v703 = vlaneseq
    %v704 = vshrl.u32 %v703, 7
    %v705 = vsub.s32 %v702, %v704
    %v706 = vrot.slane %v203, %v705
    %v708 = vunpack.c.l.s4 1983009808
    %v709 = vunpack.c.0.s8 %v708
    %v710 = vlaneseq
    %v711 = vshrl.u32 %v710, 7
    %v712 = vsub.s32 %v709, %v711
    %v713 = vrot.slane %v204, %v712
    %v715 = vunpack.c.l.s4 1983009808
    %v716 = vunpack.c.0.s8 %v715
    %v717 = vlaneseq
    %v718 = vshrl.u32 %v717, 7
    %v719 = vsub.s32 %v716, %v718
    %v720 = vrot.slane %v205, %v719
    %v722 = vunpack.c.l.s4 1983009808
    %v723 = vunpack.c.0.s8 %v722
    %v724 = vlaneseq
    %v725 = vshrl.u32 %v724, 7
    %v726 = vsub.s32 %v723, %v725
    %v727 = vrot.slane %v206, %v726
    %728 = vset.pattern.permute.xlu0 0
    %729 = vperm.xlu0 %728, %v286
    %v730 = vpop.permute.xlu0 %729
    %731 = vset.pattern.permute.xlu0 0
    %732 = vperm.xlu0 %731, %v293
    %v733 = vpop.permute.xlu0 %732
    %734 = vset.pattern.permute.xlu0 0
    %735 = vperm.xlu0 %734, %v300
    %v736 = vpop.permute.xlu0 %735
    %737 = vset.pattern.permute.xlu0 0
    %738 = vperm.xlu0 %737, %v307
    %v739 = vpop.permute.xlu0 %738
    %740 = vset.pattern.permute.xlu0 0
    %741 = vperm.xlu0 %740, %v314
    %v742 = vpop.permute.xlu0 %741
    %743 = vset.pattern.permute.xlu0 0
    %744 = vperm.xlu0 %743, %v321
    %v745 = vpop.permute.xlu0 %744
    %746 = vset.pattern.permute.xlu0 0
    %747 = vperm.xlu0 %746, %v328
    %v748 = vpop.permute.xlu0 %747
    %749 = vset.pattern.permute.xlu0 0
    %750 = vperm.xlu0 %749, %v335
    %v751 = vpop.permute.xlu0 %750
    %752 = vset.pattern.permute.xlu0 0
    %753 = vperm.xlu0 %752, %v342
    %v754 = vpop.permute.xlu0 %753
    %755 = vset.pattern.permute.xlu0 0
    %756 = vperm.xlu0 %755, %v349
    %v757 = vpop.permute.xlu0 %756
    %758 = vset.pattern.permute.xlu0 0
    %759 = vperm.xlu0 %758, %v356
    %v760 = vpop.permute.xlu0 %759
    %761 = vset.pattern.permute.xlu0 0
    %762 = vperm.xlu0 %761, %v363
    %v763 = vpop.permute.xlu0 %762
    %764 = vset.pattern.permute.xlu0 0
    %765 = vperm.xlu0 %764, %v370
    %v766 = vpop.permute.xlu0 %765
    %767 = vset.pattern.permute.xlu0 0
    %768 = vperm.xlu0 %767, %v377
    %v769 = vpop.permute.xlu0 %768
    %770 = vset.pattern.permute.xlu0 0
    %771 = vperm.xlu0 %770, %v384
    %v772 = vpop.permute.xlu0 %771
    %773 = vset.pattern.permute.xlu0 0
    %774 = vperm.xlu0 %773, %v391
    %v775 = vpop.permute.xlu0 %774
    %776 = vset.pattern.permute.xlu0 0
    %777 = vperm.xlu0 %776, %v398
    %v778 = vpop.permute.xlu0 %777
    %779 = vset.pattern.permute.xlu0 0
    %780 = vperm.xlu0 %779, %v405
    %v781 = vpop.permute.xlu0 %780
    %782 = vset.pattern.permute.xlu0 0
    %783 = vperm.xlu0 %782, %v412
    %v784 = vpop.permute.xlu0 %783
    %785 = vset.pattern.permute.xlu0 0
    %786 = vperm.xlu0 %785, %v419
    %v787 = vpop.permute.xlu0 %786
    %788 = vset.pattern.permute.xlu0 0
    %789 = vperm.xlu0 %788, %v426
    %v790 = vpop.permute.xlu0 %789
    %791 = vset.pattern.permute.xlu0 0
    %792 = vperm.xlu0 %791, %v433
    %v793 = vpop.permute.xlu0 %792
    %794 = vset.pattern.permute.xlu0 0
    %795 = vperm.xlu0 %794, %v440
    %v796 = vpop.permute.xlu0 %795
    %797 = vset.pattern.permute.xlu0 0
    %798 = vperm.xlu0 %797, %v447
    %v799 = vpop.permute.xlu0 %798
    %800 = vset.pattern.permute.xlu0 0
    %801 = vperm.xlu0 %800, %v454
    %v802 = vpop.permute.xlu0 %801
    %803 = vset.pattern.permute.xlu0 0
    %804 = vperm.xlu0 %803, %v461
    %v805 = vpop.permute.xlu0 %804
    %806 = vset.pattern.permute.xlu0 0
    %807 = vperm.xlu0 %806, %v468
    %v808 = vpop.permute.xlu0 %807
    %809 = vset.pattern.permute.xlu0 0
    %810 = vperm.xlu0 %809, %v475
    %v811 = vpop.permute.xlu0 %810
    %812 = vset.pattern.permute.xlu0 0
    %813 = vperm.xlu0 %812, %v482
    %v814 = vpop.permute.xlu0 %813
    %815 = vset.pattern.permute.xlu0 0
    %816 = vperm.xlu0 %815, %v489
    %v817 = vpop.permute.xlu0 %816
    %818 = vset.pattern.permute.xlu0 0
    %819 = vperm.xlu0 %818, %v496
    %v820 = vpop.permute.xlu0 %819
    %821 = vset.pattern.permute.xlu0 0
    %822 = vperm.xlu0 %821, %v503
    %v823 = vpop.permute.xlu0 %822
    %824 = vset.pattern.permute.xlu0 0
    %825 = vperm.xlu0 %824, %v510
    %v826 = vpop.permute.xlu0 %825
    %827 = vset.pattern.permute.xlu0 0
    %828 = vperm.xlu0 %827, %v517
    %v829 = vpop.permute.xlu0 %828
    %830 = vset.pattern.permute.xlu0 0
    %831 = vperm.xlu0 %830, %v524
    %v832 = vpop.permute.xlu0 %831
    %833 = vset.pattern.permute.xlu0 0
    %834 = vperm.xlu0 %833, %v531
    %v835 = vpop.permute.xlu0 %834
    %836 = vset.pattern.permute.xlu0 0
    %837 = vperm.xlu0 %836, %v538
    %v838 = vpop.permute.xlu0 %837
    %839 = vset.pattern.permute.xlu0 0
    %840 = vperm.xlu0 %839, %v545
    %v841 = vpop.permute.xlu0 %840
    %842 = vset.pattern.permute.xlu0 0
    %843 = vperm.xlu0 %842, %v552
    %v844 = vpop.permute.xlu0 %843
    %845 = vset.pattern.permute.xlu0 0
    %846 = vperm.xlu0 %845, %v559
    %v847 = vpop.permute.xlu0 %846
    %848 = vset.pattern.permute.xlu0 0
    %849 = vperm.xlu0 %848, %v566
    %v850 = vpop.permute.xlu0 %849
    %851 = vset.pattern.permute.xlu0 0
    %852 = vperm.xlu0 %851, %v573
    %v853 = vpop.permute.xlu0 %852
    %854 = vset.pattern.permute.xlu0 0
    %855 = vperm.xlu0 %854, %v580
    %v856 = vpop.permute.xlu0 %855
    %857 = vset.pattern.permute.xlu0 0
    %858 = vperm.xlu0 %857, %v587
    %v859 = vpop.permute.xlu0 %858
    %860 = vset.pattern.permute.xlu0 0
    %861 = vperm.xlu0 %860, %v594
    %v862 = vpop.permute.xlu0 %861
    %863 = vset.pattern.permute.xlu0 0
    %864 = vperm.xlu0 %863, %v601
    %v865 = vpop.permute.xlu0 %864
    %866 = vset.pattern.permute.xlu0 0
    %867 = vperm.xlu0 %866, %v608
    %v868 = vpop.permute.xlu0 %867
    %869 = vset.pattern.permute.xlu0 0
    %870 = vperm.xlu0 %869, %v615
    %v871 = vpop.permute.xlu0 %870
    %872 = vset.pattern.permute.xlu0 0
    %873 = vperm.xlu0 %872, %v622
    %v874 = vpop.permute.xlu0 %873
    %875 = vset.pattern.permute.xlu0 0
    %876 = vperm.xlu0 %875, %v629
    %v877 = vpop.permute.xlu0 %876
    %878 = vset.pattern.permute.xlu0 0
    %879 = vperm.xlu0 %878, %v636
    %v880 = vpop.permute.xlu0 %879
    %881 = vset.pattern.permute.xlu0 0
    %882 = vperm.xlu0 %881, %v643
    %v883 = vpop.permute.xlu0 %882
    %884 = vset.pattern.permute.xlu0 0
    %885 = vperm.xlu0 %884, %v650
    %v886 = vpop.permute.xlu0 %885
    %887 = vset.pattern.permute.xlu0 0
    %888 = vperm.xlu0 %887, %v657
    %v889 = vpop.permute.xlu0 %888
    %890 = vset.pattern.permute.xlu0 0
    %891 = vperm.xlu0 %890, %v664
    %v892 = vpop.permute.xlu0 %891
    %893 = vset.pattern.permute.xlu0 0
    %894 = vperm.xlu0 %893, %v671
    %v895 = vpop.permute.xlu0 %894
    %896 = vset.pattern.permute.xlu0 0
    %897 = vperm.xlu0 %896, %v678
    %v898 = vpop.permute.xlu0 %897
    %899 = vset.pattern.permute.xlu0 0
    %900 = vperm.xlu0 %899, %v685
    %v901 = vpop.permute.xlu0 %900
    %902 = vset.pattern.permute.xlu0 0
    %903 = vperm.xlu0 %902, %v692
    %v904 = vpop.permute.xlu0 %903
    %905 = vset.pattern.permute.xlu0 0
    %906 = vperm.xlu0 %905, %v699
    %v907 = vpop.permute.xlu0 %906
    %908 = vset.pattern.permute.xlu0 0
    %909 = vperm.xlu0 %908, %v706
    %v910 = vpop.permute.xlu0 %909
    %911 = vset.pattern.permute.xlu0 0
    %912 = vperm.xlu0 %911, %v713
    %v913 = vpop.permute.xlu0 %912
    %914 = vset.pattern.permute.xlu0 0
    %915 = vperm.xlu0 %914, %v720
    %v916 = vpop.permute.xlu0 %915
    %917 = vset.pattern.permute.xlu0 0
    %918 = vperm.xlu0 %917, %v727
    %v919 = vpop.permute.xlu0 %918
    %v920 = vlaneseq
    %v921 = vand.u32 %v920, 127
    %v922 = vlaneseq
    %v923 = vshrl.u32 %v922, 7
    %v924 = vsub.s32 %v921, %v923
    %v925 = vrot.slane %v730, %v924
    %v926 = vlaneseq
    %v927 = vshrl.u32 %v926, 7
    %v928 = vsub.s32 %v921, %v927
    %v929 = vrot.slane %v733, %v928
    %v930 = vlaneseq
    %v931 = vshrl.u32 %v930, 7
    %v932 = vsub.s32 %v921, %v931
    %v933 = vrot.slane %v736, %v932
    %v934 = vlaneseq
    %v935 = vshrl.u32 %v934, 7
    %v936 = vsub.s32 %v921, %v935
    %v937 = vrot.slane %v739, %v936
    %v938 = vlaneseq
    %v939 = vshrl.u32 %v938, 7
    %v940 = vsub.s32 %v921, %v939
    %v941 = vrot.slane %v742, %v940
    %v942 = vlaneseq
    %v943 = vshrl.u32 %v942, 7
    %v944 = vsub.s32 %v921, %v943
    %v945 = vrot.slane %v745, %v944
    %v946 = vlaneseq
    %v947 = vshrl.u32 %v946, 7
    %v948 = vsub.s32 %v921, %v947
    %v949 = vrot.slane %v748, %v948
    %v950 = vlaneseq
    %v951 = vshrl.u32 %v950, 7
    %v952 = vsub.s32 %v921, %v951
    %v953 = vrot.slane %v751, %v952
    %v954 = vlaneseq
    %v955 = vshrl.u32 %v954, 7
    %v956 = vsub.s32 %v921, %v955
    %v957 = vrot.slane %v754, %v956
    %v958 = vlaneseq
    %v959 = vshrl.u32 %v958, 7
    %v960 = vsub.s32 %v921, %v959
    %v961 = vrot.slane %v757, %v960
    %v962 = vlaneseq
    %v963 = vshrl.u32 %v962, 7
    %v964 = vsub.s32 %v921, %v963
    %v965 = vrot.slane %v760, %v964
    %v966 = vlaneseq
    %v967 = vshrl.u32 %v966, 7
    %v968 = vsub.s32 %v921, %v967
    %v969 = vrot.slane %v763, %v968
    %v970 = vlaneseq
    %v971 = vshrl.u32 %v970, 7
    %v972 = vsub.s32 %v921, %v971
    %v973 = vrot.slane %v766, %v972
    %v974 = vlaneseq
    %v975 = vshrl.u32 %v974, 7
    %v976 = vsub.s32 %v921, %v975
    %v977 = vrot.slane %v769, %v976
    %v978 = vlaneseq
    %v979 = vshrl.u32 %v978, 7
    %v980 = vsub.s32 %v921, %v979
    %v981 = vrot.slane %v772, %v980
    %v982 = vlaneseq
    %v983 = vshrl.u32 %v982, 7
    %v984 = vsub.s32 %v921, %v983
    %v985 = vrot.slane %v775, %v984
    %v986 = vlaneseq
    %v987 = vshrl.u32 %v986, 7
    %v988 = vsub.s32 %v921, %v987
    %v989 = vrot.slane %v778, %v988
    %v990 = vlaneseq
    %v991 = vshrl.u32 %v990, 7
    %v992 = vsub.s32 %v921, %v991
    %v993 = vrot.slane %v781, %v992
    %v994 = vlaneseq
    %v995 = vshrl.u32 %v994, 7
    %v996 = vsub.s32 %v921, %v995
    %v997 = vrot.slane %v784, %v996
    %v998 = vlaneseq
    %v999 = vshrl.u32 %v998, 7
    %v1000 = vsub.s32 %v921, %v999
    %v1001 = vrot.slane %v787, %v1000
    %v1002 = vlaneseq
    %v1003 = vshrl.u32 %v1002, 7
    %v1004 = vsub.s32 %v921, %v1003
    %v1005 = vrot.slane %v790, %v1004
    %v1006 = vlaneseq
    %v1007 = vshrl.u32 %v1006, 7
    %v1008 = vsub.s32 %v921, %v1007
    %v1009 = vrot.slane %v793, %v1008
    %v1010 = vlaneseq
    %v1011 = vshrl.u32 %v1010, 7
    %v1012 = vsub.s32 %v921, %v1011
    %v1013 = vrot.slane %v796, %v1012
    %v1014 = vlaneseq
    %v1015 = vshrl.u32 %v1014, 7
    %v1016 = vsub.s32 %v921, %v1015
    %v1017 = vrot.slane %v799, %v1016
    %v1018 = vlaneseq
    %v1019 = vshrl.u32 %v1018, 7
    %v1020 = vsub.s32 %v921, %v1019
    %v1021 = vrot.slane %v802, %v1020
    %v1022 = vlaneseq
    %v1023 = vshrl.u32 %v1022, 7
    %v1024 = vsub.s32 %v921, %v1023
    %v1025 = vrot.slane %v805, %v1024
    %v1026 = vlaneseq
    %v1027 = vshrl.u32 %v1026, 7
    %v1028 = vsub.s32 %v921, %v1027
    %v1029 = vrot.slane %v808, %v1028
    %v1030 = vlaneseq
    %v1031 = vshrl.u32 %v1030, 7
    %v1032 = vsub.s32 %v921, %v1031
    %v1033 = vrot.slane %v811, %v1032
    %v1034 = vlaneseq
    %v1035 = vshrl.u32 %v1034, 7
    %v1036 = vsub.s32 %v921, %v1035
    %v1037 = vrot.slane %v814, %v1036
    %v1038 = vlaneseq
    %v1039 = vshrl.u32 %v1038, 7
    %v1040 = vsub.s32 %v921, %v1039
    %v1041 = vrot.slane %v817, %v1040
    %v1042 = vlaneseq
    %v1043 = vshrl.u32 %v1042, 7
    %v1044 = vsub.s32 %v921, %v1043
    %v1045 = vrot.slane %v820, %v1044
    %v1046 = vlaneseq
    %v1047 = vshrl.u32 %v1046, 7
    %v1048 = vsub.s32 %v921, %v1047
    %v1049 = vrot.slane %v823, %v1048
    %v1050 = vlaneseq
    %v1051 = vshrl.u32 %v1050, 7
    %v1052 = vsub.s32 %v921, %v1051
    %v1053 = vrot.slane %v826, %v1052
    %v1054 = vlaneseq
    %v1055 = vshrl.u32 %v1054, 7
    %v1056 = vsub.s32 %v921, %v1055
    %v1057 = vrot.slane %v829, %v1056
    %v1058 = vlaneseq
    %v1059 = vshrl.u32 %v1058, 7
    %v1060 = vsub.s32 %v921, %v1059
    %v1061 = vrot.slane %v832, %v1060
    %v1062 = vlaneseq
    %v1063 = vshrl.u32 %v1062, 7
    %v1064 = vsub.s32 %v921, %v1063
    %v1065 = vrot.slane %v835, %v1064
    %v1066 = vlaneseq
    %v1067 = vshrl.u32 %v1066, 7
    %v1068 = vsub.s32 %v921, %v1067
    %v1069 = vrot.slane %v838, %v1068
    %v1070 = vlaneseq
    %v1071 = vshrl.u32 %v1070, 7
    %v1072 = vsub.s32 %v921, %v1071
    %v1073 = vrot.slane %v841, %v1072
    %v1074 = vlaneseq
    %v1075 = vshrl.u32 %v1074, 7
    %v1076 = vsub.s32 %v921, %v1075
    %v1077 = vrot.slane %v844, %v1076
    %v1078 = vlaneseq
    %v1079 = vshrl.u32 %v1078, 7
    %v1080 = vsub.s32 %v921, %v1079
    %v1081 = vrot.slane %v847, %v1080
    %v1082 = vlaneseq
    %v1083 = vshrl.u32 %v1082, 7
    %v1084 = vsub.s32 %v921, %v1083
    %v1085 = vrot.slane %v850, %v1084
    %v1086 = vlaneseq
    %v1087 = vshrl.u32 %v1086, 7
    %v1088 = vsub.s32 %v921, %v1087
    %v1089 = vrot.slane %v853, %v1088
    %v1090 = vlaneseq
    %v1091 = vshrl.u32 %v1090, 7
    %v1092 = vsub.s32 %v921, %v1091
    %v1093 = vrot.slane %v856, %v1092
    %v1094 = vlaneseq
    %v1095 = vshrl.u32 %v1094, 7
    %v1096 = vsub.s32 %v921, %v1095
    %v1097 = vrot.slane %v859, %v1096
    %v1098 = vlaneseq
    %v1099 = vshrl.u32 %v1098, 7
    %v1100 = vsub.s32 %v921, %v1099
    %v1101 = vrot.slane %v862, %v1100
    %v1102 = vlaneseq
    %v1103 = vshrl.u32 %v1102, 7
    %v1104 = vsub.s32 %v921, %v1103
    %v1105 = vrot.slane %v865, %v1104
    %v1106 = vlaneseq
    %v1107 = vshrl.u32 %v1106, 7
    %v1108 = vsub.s32 %v921, %v1107
    %v1109 = vrot.slane %v868, %v1108
    %v1110 = vlaneseq
    %v1111 = vshrl.u32 %v1110, 7
    %v1112 = vsub.s32 %v921, %v1111
    %v1113 = vrot.slane %v871, %v1112
    %v1114 = vlaneseq
    %v1115 = vshrl.u32 %v1114, 7
    %v1116 = vsub.s32 %v921, %v1115
    %v1117 = vrot.slane %v874, %v1116
    %v1118 = vlaneseq
    %v1119 = vshrl.u32 %v1118, 7
    %v1120 = vsub.s32 %v921, %v1119
    %v1121 = vrot.slane %v877, %v1120
    %v1122 = vlaneseq
    %v1123 = vshrl.u32 %v1122, 7
    %v1124 = vsub.s32 %v921, %v1123
    %v1125 = vrot.slane %v880, %v1124
    %v1126 = vlaneseq
    %v1127 = vshrl.u32 %v1126, 7
    %v1128 = vsub.s32 %v921, %v1127
    %v1129 = vrot.slane %v883, %v1128
    %v1130 = vlaneseq
    %v1131 = vshrl.u32 %v1130, 7
    %v1132 = vsub.s32 %v921, %v1131
    %v1133 = vrot.slane %v886, %v1132
    %v1134 = vlaneseq
    %v1135 = vshrl.u32 %v1134, 7
    %v1136 = vsub.s32 %v921, %v1135
    %v1137 = vrot.slane %v889, %v1136
    %v1138 = vlaneseq
    %v1139 = vshrl.u32 %v1138, 7
    %v1140 = vsub.s32 %v921, %v1139
    %v1141 = vrot.slane %v892, %v1140
    %v1142 = vlaneseq
    %v1143 = vshrl.u32 %v1142, 7
    %v1144 = vsub.s32 %v921, %v1143
    %v1145 = vrot.slane %v895, %v1144
    %v1146 = vlaneseq
    %v1147 = vshrl.u32 %v1146, 7
    %v1148 = vsub.s32 %v921, %v1147
    %v1149 = vrot.slane %v898, %v1148
    %v1150 = vlaneseq
    %v1151 = vshrl.u32 %v1150, 7
    %v1152 = vsub.s32 %v921, %v1151
    %v1153 = vrot.slane %v901, %v1152
    %v1154 = vlaneseq
    %v1155 = vshrl.u32 %v1154, 7
    %v1156 = vsub.s32 %v921, %v1155
    %v1157 = vrot.slane %v904, %v1156
    %v1158 = vlaneseq
    %v1159 = vshrl.u32 %v1158, 7
    %v1160 = vsub.s32 %v921, %v1159
    %v1161 = vrot.slane %v907, %v1160
    %v1162 = vlaneseq
    %v1163 = vshrl.u32 %v1162, 7
    %v1164 = vsub.s32 %v921, %v1163
    %v1165 = vrot.slane %v910, %v1164
    %v1166 = vlaneseq
    %v1167 = vshrl.u32 %v1166, 7
    %v1168 = vsub.s32 %v921, %v1167
    %v1169 = vrot.slane %v913, %v1168
    %v1170 = vlaneseq
    %v1171 = vshrl.u32 %v1170, 7
    %v1172 = vsub.s32 %v921, %v1171
    %v1173 = vrot.slane %v916, %v1172
    %v1174 = vlaneseq
    %v1175 = vshrl.u32 %v1174, 7
    %v1176 = vsub.s32 %v921, %v1175
    %v1177 = vrot.slane %v919, %v1176
    %vm1178 = vcmask 1041409
    %v1179 = vsel %vm1178, %v929, %v925
    %vm1180 = vcmask 1042434
    %v1181 = vsel %vm1180, %v933, %v1179
    %vm1182 = vcmask 1043459
    %v1183 = vsel %vm1182, %v937, %v1181
    %vm1184 = vcmask 1044484
    %v1185 = vsel %vm1184, %v941, %v1183
    %vm1186 = vcmask 1045509
    %v1187 = vsel %vm1186, %v945, %v1185
    %vm1188 = vcmask 1046534
    %v1189 = vsel %vm1188, %v949, %v1187
    %vm1190 = vcmask 1047559
    %v1191 = vsel %vm1190, %v953, %v1189
    %v1192 = vsel %vm1178, %v961, %v957
    %v1193 = vsel %vm1180, %v965, %v1192
    %v1194 = vsel %vm1182, %v969, %v1193
    %v1195 = vsel %vm1184, %v973, %v1194
    %v1196 = vsel %vm1186, %v977, %v1195
    %v1197 = vsel %vm1188, %v981, %v1196
    %v1198 = vsel %vm1190, %v985, %v1197
    %v1199 = vsel %vm1178, %v993, %v989
    %v1200 = vsel %vm1180, %v997, %v1199
    %v1201 = vsel %vm1182, %v1001, %v1200
    %v1202 = vsel %vm1184, %v1005, %v1201
    %v1203 = vsel %vm1186, %v1009, %v1202
    %v1204 = vsel %vm1188, %v1013, %v1203
    %v1205 = vsel %vm1190, %v1017, %v1204
    %v1206 = vsel %vm1178, %v1025, %v1021
    %v1207 = vsel %vm1180, %v1029, %v1206
    %v1208 = vsel %vm1182, %v1033, %v1207
    %v1209 = vsel %vm1184, %v1037, %v1208
    %v1210 = vsel %vm1186, %v1041, %v1209
    %v1211 = vsel %vm1188, %v1045, %v1210
    %v1212 = vsel %vm1190, %v1049, %v1211
    %v1213 = vsel %vm1178, %v1057, %v1053
    %v1214 = vsel %vm1180, %v1061, %v1213
    %v1215 = vsel %vm1182, %v1065, %v1214
    %v1216 = vsel %vm1184, %v1069, %v1215
    %v1217 = vsel %vm1186, %v1073, %v1216
    %v1218 = vsel %vm1188, %v1077, %v1217
    %v1219 = vsel %vm1190, %v1081, %v1218
    %v1220 = vsel %vm1178, %v1089, %v1085
    %v1221 = vsel %vm1180, %v1093, %v1220
    %v1222 = vsel %vm1182, %v1097, %v1221
    %v1223 = vsel %vm1184, %v1101, %v1222
    %v1224 = vsel %vm1186, %v1105, %v1223
    %v1225 = vsel %vm1188, %v1109, %v1224
    %v1226 = vsel %vm1190, %v1113, %v1225
    %v1227 = vsel %vm1178, %v1121, %v1117
    %v1228 = vsel %vm1180, %v1125, %v1227
    %v1229 = vsel %vm1182, %v1129, %v1228
    %v1230 = vsel %vm1184, %v1133, %v1229
    %v1231 = vsel %vm1186, %v1137, %v1230
    %v1232 = vsel %vm1188, %v1141, %v1231
    %v1233 = vsel %vm1190, %v1145, %v1232
    %v1234 = vsel %vm1178, %v1153, %v1149
    %v1235 = vsel %vm1180, %v1157, %v1234
    %v1236 = vsel %vm1182, %v1161, %v1235
    %v1237 = vsel %vm1184, %v1165, %v1236
    %v1238 = vsel %vm1186, %v1169, %v1237
    %v1239 = vsel %vm1188, %v1173, %v1238
    %v1240 = vsel %vm1190, %v1177, %v1239
    %1249 = vxpose.xlu0.b32.start [1/16] %v1191, 128
    %1250 = vxpose.xlu0.b32.cont [2/16] %v1198, 128
    %1251 = vxpose.xlu0.b32.cont [3/16] %v1205, 128
    %1252 = vxpose.xlu0.b32.cont [4/16] %v1212, 128
    %1253 = vxpose.xlu0.b32.cont [5/16] %v1219, 128
    %1254 = vxpose.xlu0.b32.cont [6/16] %v1226, 128
    %1255 = vxpose.xlu0.b32.cont [7/16] %v1233, 128
    %1256 = vxpose.xlu0.b32.cont [8/16] %v1240, 128
    %1257 = vxpose.xlu0.b32.cont [9/16] 0.0, 128
    %1258 = vxpose.xlu0.b32.cont [10/16] 0.0, 128
    %1259 = vxpose.xlu0.b32.cont [11/16] 0.0, 128
    %1260 = vxpose.xlu0.b32.cont [12/16] 0.0, 128
    %1261 = vxpose.xlu0.b32.cont [13/16] 0.0, 128
    %1262 = vxpose.xlu0.b32.cont [14/16] 0.0, 128
    %1263 = vxpose.xlu0.b32.cont [15/16] 0.0, 128
    %1264 = vxpose.xlu0.b32.end [16/16] 0.0, 128
    %v1265 = vpop.trf.xlu0
    %v1266 = vpop.trf.xlu0
    %v1267 = vpop.trf.xlu0
    %v1268 = vpop.trf.xlu0
    %v1269 = vpop.trf.xlu0
    %v1270 = vpop.trf.xlu0
    %v1271 = vpop.trf.xlu0
    %v1272 = vpop.trf.xlu0
    %v1273 = vpop.trf.xlu0
    %v1274 = vpop.trf.xlu0
    %v1275 = vpop.trf.xlu0
    %v1276 = vpop.trf.xlu0
    %v1277 = vpop.trf.xlu0
    %v1278 = vpop.trf.xlu0
    %v1279 = vpop.trf.xlu0
    %v1280 = vpop.trf.xlu0
    %vm1281 = vcmask 523264
    %v1283 = vsel %vm1281, %v1265, 0
    %v1286 = vsel %vm1281, %v207, 0
    %v1289 = vsel %vm1281, %v208, 0
    %1291 = vmatprep.subr.mxu0 0.0
    %1292 = vmatpush1.xpose.msra.mxu0 %v1286
    %1293 = vmatprep.subr.mxu0 0.0
    %1294 = vmatpush1.xpose.msra.mxu0 %v1289
    %1295 = vmatprep.subr.mxu0 0.0
    %1296 = vmatpush1.xpose.msra.mxu0 0.0
    %1297 = vmatprep.subr.mxu0 0.0
    %1298 = vmatpush1.xpose.msra.mxu0 0.0
    %1299 = vmatprep.subr.mxu0 0.0
    %1300 = vmatpush1.xpose.msra.mxu0 0.0
    %1301 = vmatprep.subr.mxu0 0.0
    %1302 = vmatpush1.xpose.msra.mxu0 0.0
    %1303 = vmatprep.subr.mxu0 0.0
    %1304 = vmatpush1.xpose.msra.mxu0 0.0
    %1305 = vmatprep.subr.mxu0 0.0
    %1306 = vmatpush1.xpose.msra.mxu0 0.0
    %1307 = vmatprep.subr.mxu0 0.0
    %1308 = vmatpush1.xpose.msra.mxu0 0.0
    %1309 = vmatprep.subr.mxu0 0.0
    %1310 = vmatpush1.xpose.msra.mxu0 0.0
    %1311 = vmatprep.subr.mxu0 0.0
    %1312 = vmatpush1.xpose.msra.mxu0 0.0
    %1313 = vmatprep.subr.mxu0 0.0
    %1314 = vmatpush1.xpose.msra.mxu0 0.0
    %1315 = vmatprep.subr.mxu0 0.0
    %1316 = vmatpush1.xpose.msra.mxu0 0.0
    %1317 = vmatprep.subr.mxu0 0.0
    %1318 = vmatpush1.xpose.msra.mxu0 0.0
    %1319 = vmatprep.subr.mxu0 0.0
    %1320 = vmatpush1.xpose.msra.mxu0 0.0
    %1321 = vmatprep.subr.mxu0 0.0
    %1322 = vmatpush1.xpose.msra.mxu0 0.0
    %1323 = vmatprep.subr.mxu0 0.0
    %1324 = vmatpush1.xpose.msra.mxu0 0.0
    %1325 = vmatprep.subr.mxu0 0.0
    %1326 = vmatpush1.xpose.msra.mxu0 0.0
    %1327 = vmatprep.subr.mxu0 0.0
    %1328 = vmatpush1.xpose.msra.mxu0 0.0
    %1329 = vmatprep.subr.mxu0 0.0
    %1330 = vmatpush1.xpose.msra.mxu0 0.0
    %1331 = vmatprep.subr.mxu0 0.0
    %1332 = vmatpush1.xpose.msra.mxu0 0.0
    %1333 = vmatprep.subr.mxu0 0.0
    %1334 = vmatpush1.xpose.msra.mxu0 0.0
    %1335 = vmatprep.subr.mxu0 0.0
    %1336 = vmatpush1.xpose.msra.mxu0 0.0
    %1337 = vmatprep.subr.mxu0 0.0
    %1338 = vmatpush1.xpose.msra.mxu0 0.0
    %1339 = vmatprep.subr.mxu0 0.0
    %1340 = vmatpush1.xpose.msra.mxu0 0.0
    %1341 = vmatprep.subr.mxu0 0.0
    %1342 = vmatpush1.xpose.msra.mxu0 0.0
    %1343 = vmatprep.subr.mxu0 0.0
    %1344 = vmatpush1.xpose.msra.mxu0 0.0
    %1345 = vmatprep.subr.mxu0 0.0
    %1346 = vmatpush1.xpose.msra.mxu0 0.0
    %1347 = vmatprep.subr.mxu0 0.0
    %1348 = vmatpush1.xpose.msra.mxu0 0.0
    %1349 = vmatprep.subr.mxu0 0.0
    %1350 = vmatpush1.xpose.msra.mxu0 0.0
    %1351 = vmatprep.subr.mxu0 0.0
    %1352 = vmatpush1.xpose.msra.mxu0 0.0
    %1353 = vmatprep.subr.mxu0 0.0
    %1354 = vmatpush1.xpose.msra.mxu0 0.0
    %1355 = vmatprep.mubr.f32.mxu0 0.0
    %1356 = vmatmul.mubr.f32.gmra.mrb[0].mxu0 %v1283
    %v1357 = vpop.f32.mrb[0].mxu0
    %v1358 = vadd.f32 %v214, %v1357
    %v1359 = vpop.f32.mrb[0].mxu0
    %1360 = vdwg.mxu0
    %vm1361 = vcmask 74752
    %1362 = vst.msk [vmem:[#allocation2] sm:$0x3] %vm1361, %v1358
    // Predicated region
    $region14: #{_lambda_.9} parent=1 // pred_check
      _
    $region15: #{_lambda_.9} parent=1 // pred_check_branch
      %1364 = sbr.rel (0) target = $region17
    $region16: #{_lambda_.9} parent=1 // pred_region
      %s1366 = ssub.s32 32, 32
      %1367 = vsyncadd [#allocation3], %s1366
      %s1369 = sshll.u32 [#allocation2], 4
      %s1370 = int_to_ptr.vmem [resolvable:$true] %s1369
      %1372 = dma.vmem_to_hbm [thread:$0]  %s1370, 32, %s3, [#allocation3]
    $region17: #{_lambda_.9} parent=1 // pred_fallthru
      _
    // Predicated region
    $region18: #{_lambda_.9} parent=1 // pred_check
      _
    $region19: #{_lambda_.9} parent=1 // pred_check_branch
      %1374 = sbr.rel (0) target = $region21
    $region20: #{_lambda_.9} parent=1 // pred_region
      %1375 = dma.done [#allocation3], 32
    $region21: #{_lambda_.9} parent=1 // pred_fallthru
      _
    %1376 = vsyncpa [#allocation3], 1

</llo_original>
